<compile_context>
chip_gen: v5e
topology: v5e:2x2
jax: 0.10.0
libtpu: 0.0.40
codegen_flags: <defaults>
</compile_context>

<pallas_src>
import functools
import math

import jax
import jax.numpy as jnp
from jax.experimental import pallas as pl
from jax.experimental.pallas import tpu as pltpu

RESNET_BLOCKS = (1, 1, 1, 1)
BN_EPS = 1e-5
_VMEM_LIMIT = 32 * 1024 * 1024
ACT_DT = jnp.bfloat16


# ----------------------------------------------------------------------------
# small helpers
# ----------------------------------------------------------------------------
def _round_up(v, m):
    return -(-v // m) * m


def _pick_div(size, prefs):
    for t in prefs:
        if t <= size and size % t == 0:
            return t
    return size


def _row_tile(m, target=1024):
    if m <= target:
        return m
    return _pick_div(m, (1024, 512, 256, 128, 64, 32, 16, 8))


class KeyGen:
    def __init__(self, key):
        self.key = key

    def __call__(self):
        self.key, sub = jax.random.split(self.key)
        return sub


# ----------------------------------------------------------------------------
# Pallas MXU matmul: bf16 operands, f32 VMEM scratch accumulator, bf16 output
# ----------------------------------------------------------------------------
def _matmul_kernel(a_ref, b_ref, o_ref, acc_ref):
    k = pl.program_id(2)

    @pl.when(k == 0)
    def _():
        acc_ref[...] = jnp.zeros_like(acc_ref)

    acc_ref[...] += jnp.dot(a_ref[...], b_ref[...],
                            preferred_element_type=jnp.float32)

    @pl.when(k == pl.num_programs(2) - 1)
    def _():
        o_ref[...] = acc_ref[...].astype(o_ref.dtype)


@functools.lru_cache(maxsize=None)
def _matmul_call(m, kp, np_, tm, tk, tn):
    call = pl.pallas_call(
        _matmul_kernel,
        out_shape=jax.ShapeDtypeStruct((m, np_), ACT_DT),
        grid=(m // tm, np_ // tn, kp // tk),
        in_specs=[pl.BlockSpec((tm, tk), lambda i, j, k: (i, k)),
                  pl.BlockSpec((tk, tn), lambda i, j, k: (k, j))],
        out_specs=pl.BlockSpec((tm, tn), lambda i, j, k: (i, j)),
        scratch_shapes=[pltpu.VMEM((tm, tn), jnp.float32)],
        compiler_params=pltpu.CompilerParams(
            dimension_semantics=("parallel", "parallel", "arbitrary"),
            vmem_limit_bytes=_VMEM_LIMIT),
    )
    return jax.jit(call)


def matmul(a, b):
    """a: [M, K], b: [K, N] -> [M, N] bf16 (MXU, f32 accumulation)."""
    m, k = a.shape
    k2, n = b.shape
    assert k == k2
    kp = _round_up(k, 128)
    np_ = _round_up(n, 128)
    a = a.astype(ACT_DT)
    b = b.astype(ACT_DT)
    if kp != k:
        a = jnp.pad(a, ((0, 0), (0, kp - k)))
    if kp != k or np_ != n:
        b = jnp.pad(b, ((0, kp - k), (0, np_ - n)))
    tm = m if m <= 512 else _pick_div(m, (512, 256, 128, 64, 32, 16, 8))
    tk = _pick_div(kp, (512, 256, 128))
    tn = _pick_div(np_, (256, 128))
    out = _matmul_call(m, kp, np_, tm, tk, tn)(a, b)
    return out if np_ == n else out[:, :n]


# ----------------------------------------------------------------------------
# conv wrappers (bf16 im2col glue + Pallas matmul)
# ----------------------------------------------------------------------------
def _extract_patches(x, kh, kw, stride, pad, extra_taps=0, pad_value=0.0):
    n, h, w, c = x.shape
    xp = jnp.pad(x, ((0, 0), (pad, pad), (pad, pad), (0, 0)),
                 constant_values=pad_value)
    ho = (h + 2 * pad - kh) // stride + 1
    wo = (w + 2 * pad - kw) // stride + 1
    cols = []
    for i in range(kh):
        for j in range(kw):
            cols.append(xp[:, i:i + (ho - 1) * stride + 1:stride,
                           j:j + (wo - 1) * stride + 1:stride, :])
    for _ in range(extra_taps):
        cols.append(jnp.zeros_like(cols[0]))
    patches = jnp.stack(cols, axis=3)
    return patches, (n, ho, wo)


def conv2d(x, w, stride, pad):
    """NHWC conv; weight [kh, kw, cin, cout]."""
    kh, kw, cin, cout = w.shape
    x = x.astype(ACT_DT)
    if kh == 1 and kw == 1 and pad == 0:
        if stride != 1:
            x = x[:, ::stride, ::stride, :]
        n, ho, wo, _ = x.shape
        out = matmul(x.reshape(n * ho * wo, cin), w.reshape(cin, cout))
        return out.reshape(n, ho, wo, cout)
    # pad K (= taps * cin) up to a multiple of 256 with zero taps when cheap,
    # so the matmul uses tk >= 256 without a separate K-pad copy of the slab.
    extra = 0
    for e in range(0, 8):
        if ((kh * kw + e) * cin) % 256 == 0:
            extra = e
            break
    patches, (n, ho, wo) = _extract_patches(x, kh, kw, stride, pad, extra)
    kdim = (kh * kw + extra) * cin
    a = patches.reshape(n * ho * wo, kdim)
    w2 = w.reshape(kh * kw * cin, cout)
    if extra:
        w2 = jnp.pad(w2, ((0, extra * cin), (0, 0)))
    out = matmul(a, w2)
    return out.reshape(n, ho, wo, cout)


def conv_transpose2x2(x, w):
    # ConvTranspose2d(kernel=2, stride=2, pad=0); w: [cin, 2, 2, cout]
    # TODO(synk): the sub-pixel interleave is still an XLA transpose; a strided
    #             out_spec writeback from the matmul would remove this copy.
    n, h, wd, cin = x.shape
    cout = w.shape[-1]
    y = matmul(x.reshape(n * h * wd, cin).astype(ACT_DT),
               w.reshape(cin, 4 * cout))
    y = y.reshape(n, h, wd, 2, 2, cout).transpose(0, 1, 3, 2, 4, 5)
    return y.reshape(n, 2 * h, 2 * wd, cout)


# ----------------------------------------------------------------------------
# BatchNorm (train-mode batch statistics), tiled two-pass Pallas kernels
# ----------------------------------------------------------------------------
def _bn_kernel(x_ref, g_ref, b_ref, o_ref, sum_ref, sq_ref, *, m_total, relu):
    p = pl.program_id(0)
    i = pl.program_id(1)

    @pl.when(jnp.logical_and(p == 0, i == 0))
    def _():
        sum_ref[...] = jnp.zeros_like(sum_ref)
        sq_ref[...] = jnp.zeros_like(sq_ref)

    x = x_ref[...].astype(jnp.float32)

    @pl.when(p == 0)
    def _():
        sum_ref[...] += jnp.sum(x, axis=0, keepdims=True)
        sq_ref[...] += jnp.sum(x * x, axis=0, keepdims=True)

    @pl.when(p == 1)
    def _():
        inv_m = 1.0 / m_total
        mean = sum_ref[...] * inv_m
        var = jnp.maximum(sq_ref[...] * inv_m - mean * mean, 0.0)
        y = (x - mean) * jax.lax.rsqrt(var + BN_EPS) * g_ref[...] + b_ref[...]
        if relu:
            y = jnp.maximum(y, 0.0)
        o_ref[...] = y.astype(o_ref.dtype)


def _bn_add_relu_kernel(x_ref, r_ref, g_ref, b_ref, o_ref, sum_ref, sq_ref,
                        *, m_total):
    p = pl.program_id(0)
    i = pl.program_id(1)

    @pl.when(jnp.logical_and(p == 0, i == 0))
    def _():
        sum_ref[...] = jnp.zeros_like(sum_ref)
        sq_ref[...] = jnp.zeros_like(sq_ref)

    x = x_ref[...].astype(jnp.float32)

    @pl.when(p == 0)
    def _():
        sum_ref[...] += jnp.sum(x, axis=0, keepdims=True)
        sq_ref[...] += jnp.sum(x * x, axis=0, keepdims=True)

    @pl.when(p == 1)
    def _():
        inv_m = 1.0 / m_total
        mean = sum_ref[...] * inv_m
        var = jnp.maximum(sq_ref[...] * inv_m - mean * mean, 0.0)
        y = (x - mean) * jax.lax.rsqrt(var + BN_EPS) * g_ref[...] + b_ref[...]
        y = y + r_ref[...].astype(jnp.float32)
        o_ref[...] = jnp.maximum(y, 0.0).astype(o_ref.dtype)


@functools.lru_cache(maxsize=None)
def _bn_call(m, c, tile, relu):
    kernel = functools.partial(_bn_kernel, m_total=m, relu=relu)
    call = pl.pallas_call(
        kernel,
        out_shape=jax.ShapeDtypeStruct((m, c), ACT_DT),
        grid=(2, m // tile),
        in_specs=[pl.BlockSpec((tile, c), lambda p, i: (i, 0)),
                  pl.BlockSpec((1, c), lambda p, i: (0, 0)),
                  pl.BlockSpec((1, c), lambda p, i: (0, 0))],
        out_specs=pl.BlockSpec((tile, c), lambda p, i: (p * i, 0)),
        scratch_shapes=[pltpu.VMEM((1, c), jnp.float32),
                        pltpu.VMEM((1, c), jnp.float32)],
        compiler_params=pltpu.CompilerParams(
            dimension_semantics=("arbitrary", "arbitrary"),
            vmem_limit_bytes=_VMEM_LIMIT),
    )
    return jax.jit(call)


@functools.lru_cache(maxsize=None)
def _bn_add_relu_call(m, c, tile):
    kernel = functools.partial(_bn_add_relu_kernel, m_total=m)
    call = pl.pallas_call(
        kernel,
        out_shape=jax.ShapeDtypeStruct((m, c), ACT_DT),
        grid=(2, m // tile),
        in_specs=[pl.BlockSpec((tile, c), lambda p, i: (i, 0)),
                  pl.BlockSpec((tile, c), lambda p, i: (i, 0)),
                  pl.BlockSpec((1, c), lambda p, i: (0, 0)),
                  pl.BlockSpec((1, c), lambda p, i: (0, 0))],
        out_specs=pl.BlockSpec((tile, c), lambda p, i: (p * i, 0)),
        scratch_shapes=[pltpu.VMEM((1, c), jnp.float32),
                        pltpu.VMEM((1, c), jnp.float32)],
        compiler_params=pltpu.CompilerParams(
            dimension_semantics=("arbitrary", "arbitrary"),
            vmem_limit_bytes=_VMEM_LIMIT),
    )
    return jax.jit(call)


def bn_act(x, gamma, beta, relu):
    n, h, w, c = x.shape
    m = n * h * w
    tile = _row_tile(m)
    out = _bn_call(m, c, tile, relu)(x.reshape(m, c), gamma, beta)
    return out.reshape(n, h, w, c)


def bn_add_relu(x, res, gamma, beta):
    n, h, w, c = x.shape
    m = n * h * w
    tile = _row_tile(m)
    out = _bn_add_relu_call(m, c, tile)(
        x.reshape(m, c), res.reshape(m, c), gamma, beta)
    return out.reshape(n, h, w, c)


# ----------------------------------------------------------------------------
# fused per-stage attention (channel attn -> 7x7 spatial attn -> fuse) kernel
# ----------------------------------------------------------------------------
def _stage_attention_kernel(rgb_ref, th_ref, w1_ref, w2_ref, sw_ref,
                            fused_ref, thca_ref, s_ref, *, hdim, wdim,
                            base_is_x):
    w1 = w1_ref[...]
    w2 = w2_ref[...]

    def chan_att(x):                                    # x: (H, W, C) f32
        cm = jnp.max(x, axis=0)                         # (W, C)
        cm = jnp.max(cm, axis=0, keepdims=True)         # (1, C)
        h1 = jnp.maximum(
            jnp.dot(cm, w1, preferred_element_type=jnp.float32), 0.0)
        att = jax.nn.sigmoid(
            jnp.dot(h1, w2, preferred_element_type=jnp.float32))
        return x * att.reshape(1, 1, -1)

    def spatial_att(src):                               # (H, W, C) -> (H, W, 1)
        m0 = jnp.max(src, axis=2, keepdims=True)        # (H, W, 1)
        s_ref[...] = jnp.zeros(s_ref.shape, jnp.float32)
        for a in range(-3, 4):
            oi0, oi1 = max(0, -a), min(hdim, hdim - a)
            if oi1 <= oi0:
                continue
            for b in range(-3, 4):
                oj0, oj1 = max(0, -b), min(wdim, wdim - b)
                if oj1 <= oj0:
                    continue
                t = (a + 3) * 7 + (b + 3)
                s_ref[oi0:oi1, oj0:oj1, :] += (
                    sw_ref[t] * m0[oi0 + a:oi1 + a, oj0 + b:oj1 + b, :])
        return jax.nn.sigmoid(s_ref[...])

    rgb = rgb_ref[0].astype(jnp.float32)
    th = th_ref[0].astype(jnp.float32)

    rgb_ca = chan_att(rgb)
    rgb_att = rgb_ca * spatial_att(rgb_ca)

    th_ca = chan_att(th)
    thca_ref[0] = th_ca.astype(thca_ref.dtype)
    base = th if base_is_x else th_ca
    temp = base * spatial_att(th_ca)

    fused_ref[0] = (rgb_att + temp).astype(fused_ref.dtype)


@functools.lru_cache(maxsize=None)
def _stage_attention_call(n, h, w, c, cr, base_is_x):
    kernel = functools.partial(_stage_attention_kernel, hdim=h, wdim=w,
                               base_is_x=base_is_x)
    call = pl.pallas_call(
        kernel,
        out_shape=(jax.ShapeDtypeStruct((n, h, w, c), ACT_DT),
                   jax.ShapeDtypeStruct((n, h, w, c), ACT_DT)),
        grid=(n,),
        in_specs=[pl.BlockSpec((1, h, w, c), lambda b: (b, 0, 0, 0)),
                  pl.BlockSpec((1, h, w, c), lambda b: (b, 0, 0, 0)),
                  pl.BlockSpec((c, cr), lambda b: (0, 0)),
                  pl.BlockSpec((cr, c), lambda b: (0, 0)),
                  pl.BlockSpec(memory_space=pltpu.MemorySpace.SMEM)],
        out_specs=(pl.BlockSpec((1, h, w, c), lambda b: (b, 0, 0, 0)),
                   pl.BlockSpec((1, h, w, c), lambda b: (b, 0, 0, 0))),
        scratch_shapes=[pltpu.VMEM((h, w, 1), jnp.float32)],
        compiler_params=pltpu.CompilerParams(
            dimension_semantics=("parallel",),
            vmem_limit_bytes=_VMEM_LIMIT),
    )
    return jax.jit(call)


def stage_attention(rgb, th, ca_w, sa_w, spatial_base_is_x=False):
    """Returns (rgb*ca*sa + temp, thermal*ca) for one fusion stage."""
    n, h, w, c = rgb.shape
    w1, w2 = ca_w
    fn = _stage_attention_call(n, h, w, c, int(w1.shape[1]),
                               bool(spatial_base_is_x))
    fused, thca = fn(rgb.astype(ACT_DT), th.astype(ACT_DT), w1, w2, sa_w)
    return fused, thca


# ----------------------------------------------------------------------------
# 3x3 / stride-2 / pad-1 max-pool (9 shifted taps -> tiled elementwise max)
# ----------------------------------------------------------------------------
def _pool9_kernel(*refs):
    o_ref = refs[-1]
    r = refs[0][...]
    for pr in refs[1:-1]:
        r = jnp.maximum(r, pr[...])
    o_ref[...] = r


@functools.lru_cache(maxsize=None)
def _pool_call(m, c, tile):
    call = pl.pallas_call(
        _pool9_kernel,
        out_shape=jax.ShapeDtypeStruct((m, c), ACT_DT),
        grid=(m // tile,),
        in_specs=[pl.BlockSpec((tile, c), lambda i: (i, 0)) for _ in range(9)],
        out_specs=pl.BlockSpec((tile, c), lambda i: (i, 0)),
        compiler_params=pltpu.CompilerParams(
            dimension_semantics=("parallel",),
            vmem_limit_bytes=_VMEM_LIMIT),
    )
    return jax.jit(call)


def maxpool3x3s2p1(x):
    # TODO(synk): the 9 taps are still strided XLA slices; an in-kernel strided
    #             read of the padded input would cut the tap traffic ~9x.
    n, h, w, c = x.shape
    x = x.astype(ACT_DT)
    xp = jnp.pad(x, ((0, 0), (1, 1), (1, 1), (0, 0)),
                 constant_values=-jnp.inf)
    ho = (h - 1) // 2 + 1
    wo = (w - 1) // 2 + 1
    taps = []
    for i in range(3):
        for j in range(3):
            taps.append(xp[:, i:i + (ho - 1) * 2 + 1:2,
                           j:j + (wo - 1) * 2 + 1:2, :].reshape(n * ho * wo, c))
    m = n * ho * wo
    tile = _row_tile(m)
    out = _pool_call(m, c, tile)(*taps)
    return out.reshape(n, ho, wo, c)


# ----------------------------------------------------------------------------
# synthetic parameters
# ----------------------------------------------------------------------------
def conv_w(kg, kh, kw, cin, cout):
    return jax.random.normal(kg(), (kh, kw, cin, cout), jnp.float32) * (
        1.0 / math.sqrt(kh * kw * cin))


def conv_t_w(kg, cin, cout):
    return jax.random.normal(kg(), (cin, 2, 2, cout), jnp.float32) * (
        1.0 / math.sqrt(4 * cin))


def bn_p(c):
    return (jnp.ones((1, c), jnp.float32), jnp.zeros((1, c), jnp.float32))


def _pad_w(w, cin_pad, cout_pad):
    kh, kw, cin, cout = w.shape
    return jnp.pad(w, ((0, 0), (0, 0), (0, cin_pad - cin), (0, cout_pad - cout)))


def _pad_tw(w, cin_pad, cout_pad):
    cin, _, _, cout = w.shape
    return jnp.pad(w, ((0, cin_pad - cin), (0, 0), (0, 0), (0, cout_pad - cout)))


def make_bottleneck(kg, inplanes, width, stride, downsample):
    p = {"stride": stride,
         "w1": conv_w(kg, 1, 1, inplanes, width), "bn1": bn_p(width),
         "w2": conv_w(kg, 3, 3, width, width), "bn2": bn_p(width),
         "w3": conv_w(kg, 1, 1, width, width * 4), "bn3": bn_p(width * 4)}
    if downsample:
        p["wd"] = conv_w(kg, 1, 1, inplanes, width * 4)
        p["bnd"] = bn_p(width * 4)
    return p


def make_encoder(kg, cin):
    enc = {"conv1": conv_w(kg, 7, 7, cin, 64), "bn1": bn_p(64)}
    layers = []
    inplanes = 64
    for width, stride, nb in zip((64, 128, 256, 512), (1, 2, 2, 2),
                                 RESNET_BLOCKS):
        blks = []
        for bi in range(nb):
            s = stride if bi == 0 else 1
            need_ds = (bi == 0) and (s != 1 or inplanes != width * 4)
            blks.append(make_bottleneck(kg, inplanes, width, s, need_ds))
            inplanes = width * 4
        layers.append(blks)
    enc["layers"] = layers
    return enc


def make_channel_attention(kg, c, ratio=16):
    cr = c // ratio
    w1 = jax.random.normal(kg(), (c, cr), jnp.float32) * (1.0 / math.sqrt(c))
    w2 = jax.random.normal(kg(), (cr, c), jnp.float32) * (1.0 / math.sqrt(cr))
    return (w1, w2)


def make_spatial_attention(kg):
    return jax.random.normal(kg(), (49,), jnp.float32) * (1.0 / 7.0)


def make_transbottleneck(kg, inplanes, planes, stride, has_upsample,
                         planes_pad=None):
    # planes_pad keeps n_class channels zero-padded to 128 lanes (lane-dense
    # stores); the padded channels stay exactly zero through conv/BN/ReLU.
    pp = planes if planes_pad is None else planes_pad
    padded = pp != planes
    p = {"stride": stride, "has_upsample": has_upsample,
         "bn1": bn_p(pp), "bn2": bn_p(pp), "bn3": bn_p(pp)}
    w1 = conv_w(kg, 1, 1, inplanes, planes)
    w2 = conv_w(kg, 3, 3, planes, planes)
    p["w1"] = _pad_w(w1, inplanes, pp) if padded else w1
    p["w2"] = _pad_w(w2, pp, pp) if padded else w2
    if has_upsample and stride != 1:
        w3t = conv_t_w(kg, planes, planes)
        p["w3t"] = _pad_tw(w3t, pp, pp) if padded else w3t
    else:
        w3 = conv_w(kg, 3, 3, planes, planes)
        p["w3"] = _pad_w(w3, pp, pp) if padded else w3
    if has_upsample:
        upw = conv_t_w(kg, inplanes, planes)
        p["up_w"] = _pad_tw(upw, inplanes, pp) if padded else upw
        p["up_bn"] = bn_p(pp)
    return p


def make_deconvs(kg, n_class, n_class_pad):
    deconvs = []
    inplanes = 2048
    for idx in range(5):
        if idx == 4:
            planes, pp = n_class, n_class_pad
        else:
            planes, pp = inplanes // 2, inplanes // 2
        blocks = [make_transbottleneck(kg, inplanes, inplanes, 1, False),
                  make_transbottleneck(kg, inplanes, planes, 2, True,
                                       planes_pad=pp)]
        deconvs.append(blocks)
        inplanes = pp
    return deconvs


def build_feanet_params(key, n_class):
    kg = KeyGen(key)
    return {
        "rgb": make_encoder(kg, 3),
        "th": make_encoder(kg, 1),     # thermal conv1 is single-channel
        "ca": [make_channel_attention(kg, c)
               for c in (64, 256, 512, 1024, 2048)],
        "sa": [make_spatial_attention(kg) for _ in range(5)],
        "deconv": make_deconvs(kg, n_class, _round_up(n_class, 128)),
        "n_class": n_class,
    }


# ----------------------------------------------------------------------------
# module forward passes
# ----------------------------------------------------------------------------
def bottleneck_fwd(p, x):
    out = conv2d(x, p["w1"], 1, 0)
    out = bn_act(out, *p["bn1"], relu=True)
    out = conv2d(out, p["w2"], p["stride"], 1)
    out = bn_act(out, *p["bn2"], relu=True)
    out = conv2d(out, p["w3"], 1, 0)
    if "wd" in p:
        res = conv2d(x, p["wd"], p["stride"], 0)
        res = bn_act(res, *p["bnd"], relu=False)
    else:
        res = x
    return bn_add_relu(out, res, *p["bn3"])


def run_layer(blocks, x):
    for b in blocks:
        x = bottleneck_fwd(b, x)
    return x


def transbottleneck_fwd(p, x):
    out = conv2d(x, p["w1"], 1, 0)
    out = bn_act(out, *p["bn1"], relu=True)
    out = conv2d(out, p["w2"], 1, 1)
    out = bn_act(out, *p["bn2"], relu=True)
    if "w3t" in p:
        out = conv_transpose2x2(out, p["w3t"])
    else:
        out = conv2d(out, p["w3"], p["stride"], 1)
    if p["has_upsample"]:
        res = conv_transpose2x2(x, p["up_w"])
        res = bn_act(res, *p["up_bn"], relu=False)
    else:
        res = x
    return bn_add_relu(out, res, *p["bn3"])


def feanet_forward(params, x_nchw):
    x = jnp.transpose(x_nchw, (0, 2, 3, 1)).astype(jnp.float32)  # NCHW -> NHWC
    rgb = x[..., :3]
    th = x[..., 3:]

    # stems
    rgb = conv2d(rgb, params["rgb"]["conv1"], 2, 3)
    rgb = bn_act(rgb, *params["rgb"]["bn1"], relu=True)
    th = conv2d(th, params["th"]["conv1"], 2, 3)
    th = bn_act(th, *params["th"]["bn1"], relu=True)

    # stage 0 attention fusion (thermal itself is NOT modified)
    rgb, _ = stage_attention(rgb, th, params["ca"][0], params["sa"][0], False)

    rgb = maxpool3x3s2p1(rgb)
    th = maxpool3x3s2p1(th)

    # layer1 + stage 1 (thermal IS updated by channel attention, per torch code)
    rgb = run_layer(params["rgb"]["layers"][0], rgb)
    th = run_layer(params["th"]["layers"][0], th)
    rgb, th = stage_attention(rgb, th, params["ca"][1], params["sa"][1], False)

    # layer2 + stage 2
    rgb = run_layer(params["rgb"]["layers"][1], rgb)
    th = run_layer(params["th"]["layers"][1], th)
    rgb, _ = stage_attention(rgb, th, params["ca"][2], params["sa"][2], False)

    # layer3 + stage 3 (temp = thermal * sa(thermal*ca), per torch code)
    rgb = run_layer(params["rgb"]["layers"][2], rgb)
    th = run_layer(params["th"]["layers"][2], th)
    rgb, _ = stage_attention(rgb, th, params["ca"][3], params["sa"][3], True)

    # layer4 + stage 4
    rgb = run_layer(params["rgb"]["layers"][3], rgb)
    th = run_layer(params["th"]["layers"][3], th)
    fuse, _ = stage_attention(rgb, th, params["ca"][4], params["sa"][4], False)

    # decoder (last stage runs with n_class padded to 128 lanes)
    for deconv in params["deconv"]:
        for blk in deconv:
            fuse = transbottleneck_fwd(blk, fuse)

    fuse = fuse[..., :params["n_class"]]                          # un-pad once
    return jnp.transpose(fuse, (0, 3, 1, 2)).astype(jnp.float32)  # NHWC->NCHW


# ----------------------------------------------------------------------------
if __name__ == "__main__":
    N_CLASS = 9
    B, H, W = 2, 32, 32                                   # 4-channel RGBT input

    params = build_feanet_params(jax.random.PRNGKey(1), N_CLASS)
    x = jax.random.normal(jax.random.PRNGKey(0), (B, 4, H, W), jnp.float32)

    out = feanet_forward(params, x)
    out = jax.block_until_ready(out)

    assert out.shape == (B, N_CLASS, H, W), out.shape
    assert out.dtype == jnp.float32
    print("KERNEL_OK")
</pallas_src>

<mosaic_0001>
module attributes {stable_mosaic.version = 11 : i64} {
  func.func @_matmul_kernel(%arg0: i32, %arg1: i32, %arg2: i32, %arg3: memref<512x256xbf16, #tpu.memory_space<vmem>>, %arg4: memref<256x128xbf16, #tpu.memory_space<vmem>>, %arg5: memref<512x128xbf16, #tpu.memory_space<vmem>>, %arg6: memref<512x128xf32, #tpu.memory_space<vmem>>) attributes {dimension_semantics = [#tpu.dimension_semantics<parallel>, #tpu.dimension_semantics<parallel>, #tpu.dimension_semantics<arbitrary>], iteration_bounds = array<i64: 1, 1, 1>, scalar_prefetch = 0 : i64, scratch_operands = 1 : i64, tpu.core_type = #tpu.core_type<tc>, window_params = [{transform_indices = @transform_0, window_bounds = array<i64: 512, 256>}, {transform_indices = @transform_1, window_bounds = array<i64: 256, 128>}, {transform_indices = @transform_2, window_bounds = array<i64: 512, 128>}]} {
    %c0_i32 = arith.constant 0 : i32
    %0 = arith.cmpi eq, %arg2, %c0_i32 : i32
    %1 = arith.extui %0 : i1 to i32
    %c0_i32_0 = arith.constant 0 : i32
    %2 = arith.cmpi ne, %1, %c0_i32_0 : i32
    scf.if %2 {
      %cst_10 = arith.constant 0.000000e+00 : f32
      %12 = vector.broadcast %cst_10 : f32 to vector<512x128xf32>
      %c0_11 = arith.constant 0 : index
      %c0_12 = arith.constant 0 : index
      %13 = vector.load %arg6[%c0_11, %c0_12] : memref<512x128xf32, #tpu.memory_space<vmem>>, vector<512x128xf32>
      tpu.vector_store %arg6[%c0_11, %c0_12], %12 {strides = array<i32>} : memref<512x128xf32, #tpu.memory_space<vmem>>, vector<512x128xf32>,
    } else {
    }
    %c0 = arith.constant 0 : index
    %c0_1 = arith.constant 0 : index
    %3 = vector.load %arg6[%c0, %c0_1] : memref<512x128xf32, #tpu.memory_space<vmem>>, vector<512x128xf32>
    %c0_2 = arith.constant 0 : index
    %c0_3 = arith.constant 0 : index
    %4 = vector.load %arg3[%c0_2, %c0_3] : memref<512x256xbf16, #tpu.memory_space<vmem>>, vector<512x256xbf16>
    %c0_4 = arith.constant 0 : index
    %c0_5 = arith.constant 0 : index
    %5 = vector.load %arg4[%c0_4, %c0_5] : memref<256x128xbf16, #tpu.memory_space<vmem>>, vector<256x128xbf16>
    %cst = arith.constant dense<0.000000e+00> : vector<512x128xf32>
    %6 = tpu.matmul %4, %5, %cst {dimension_numbers = #tpu.dot_dimension_numbers<[1], [0], [0], [1], [0, 0, 1, 1], [], []>} : vector<512x256xbf16>, vector<256x128xbf16>, vector<512x128xf32> -> vector<512x128xf32>
    %7 = arith.addf %3, %6 : vector<512x128xf32>
    %c0_6 = arith.constant 0 : index
    %c0_7 = arith.constant 0 : index
    %8 = vector.load %arg6[%c0_6, %c0_7] : memref<512x128xf32, #tpu.memory_space<vmem>>, vector<512x128xf32>
    tpu.vector_store %arg6[%c0_6, %c0_7], %7 {strides = array<i32>} : memref<512x128xf32, #tpu.memory_space<vmem>>, vector<512x128xf32>,
    %c0_i32_8 = arith.constant 0 : i32
    %9 = arith.cmpi eq, %arg2, %c0_i32_8 : i32
    %10 = arith.extui %9 : i1 to i32
    %c0_i32_9 = arith.constant 0 : i32
    %11 = arith.cmpi ne, %10, %c0_i32_9 : i32
    scf.if %11 {
      %c0_10 = arith.constant 0 : index
      %c0_11 = arith.constant 0 : index
      %12 = vector.load %arg6[%c0_10, %c0_11] : memref<512x128xf32, #tpu.memory_space<vmem>>, vector<512x128xf32>
      %13 = arith.truncf %12 : vector<512x128xf32> to vector<512x128xbf16>
      %c0_12 = arith.constant 0 : index
      %c0_13 = arith.constant 0 : index
      %14 = vector.load %arg5[%c0_12, %c0_13] : memref<512x128xbf16, #tpu.memory_space<vmem>>, vector<512x128xbf16>
      tpu.vector_store %arg5[%c0_12, %c0_13], %13 {strides = array<i32>} : memref<512x128xbf16, #tpu.memory_space<vmem>>, vector<512x128xbf16>,
    } else {
    }
    return
  }
  func.func @transform_0(%arg0: i32, %arg1: i32, %arg2: i32) -> (i32, i32) {
    %c0_i32 = arith.constant 0 : i32
    return %arg0, %arg2 : i32, i32
  }
  func.func @transform_1(%arg0: i32, %arg1: i32, %arg2: i32) -> (i32, i32) {
    %c0_i32 = arith.constant 0 : i32
    return %arg2, %arg1 : i32, i32
  }
  func.func @transform_2(%arg0: i32, %arg1: i32, %arg2: i32) -> (i32, i32) {
    %c0_i32 = arith.constant 0 : i32
    return %arg0, %arg1 : i32, i32
  }
}

</mosaic_0001>

<llo_original>
// kernel: tpu_custom_call.1
$region0: #{tpu_custom_call.1}
  #allocation0 [shape = 'u32[]', space=smem, size = 0x4, offset = 0x4, fixed_abs, tag = 'smem constant byte address 0x4 - core index']
  #allocation1 [shape = 'u32[72,128]{1,0:T(1,128)}', space=vmem, size = 0x9000, scoped, tag = 'internal scratch']
  #allocation2 [shape = 'f32[512,128]{1,0:T(8,128)}', space=vmem, size = 0x40000, scoped, tag = 'scratch operand']
  %s0 = inlined_call_operand.hbm [shape: bf16[512,256], index: 0, kind: input, shape index: {}]
  %s1 = inlined_call_operand.hbm [shape: bf16[256,128], index: 1, kind: input, shape index: {}]
  %s2 = inlined_call_operand.hbm [shape: bf16[512,128], index: 2, kind: output, shape index: {}]
  %s3 = sld [smem:[#allocation0]]
  $region34: #{tpu_custom_call.1} parent=0
    _
  %s5 = ssub.s32 1, %s3
  %s6 = scalar_select 0, %s5, %s3
  $region1: #{tpu_custom_call.1} parent=0
    #allocation3 [shape = 'u8[262144]{0}', space=vmem, size = 0x40000, scoped, tag = 'input window, operand 0, single buffered']
    #allocation4 [shape = 's32[1]{0}', space=sflag, size = 0x4, scoped, tag = 'scoped memory for tpu_custom_call.1']
    #allocation5 [shape = 's32[1]{0}', space=sflag, size = 0x4, scoped, tag = 'scoped memory for tpu_custom_call.1']
    #allocation6 [shape = 'u8[65536]{0}', space=vmem, size = 0x10000, scoped, tag = 'input window, operand 1, single buffered']
    #allocation7 [shape = 's32[1]{0}', space=sflag, size = 0x4, scoped, tag = 'scoped memory for tpu_custom_call.1']
    #allocation8 [shape = 'u8[131072]{0}', space=vmem, size = 0x20000, scoped, tag = 'output window, operand 0, single buffered']
    %7 = vsyncpa [#allocation4], 0
    %8 = vsyncpa [#allocation7], 0
    %9 = vsyncpa [#allocation5], 0
    // Predicated region
    $region2: #{tpu_custom_call.1} parent=1 // pred_check
      _
    $region3: #{tpu_custom_call.1} parent=1 // pred_check_branch
      %11 = sbr.rel (0) target = $region5
    $region4: #{tpu_custom_call.1} parent=1 // pred_region
      %13 = vsyncadd [#allocation4], 0
      %s14 = sshll.u32 %s0, 4
      %s15 = int_to_ptr.hbm [resolvable:$true] %s14
      %s16 = sshll.u32 [#allocation3], 4
      %s17 = int_to_ptr.vmem [resolvable:$true] %s16
      %22 = dma.hbm_to_vmem [thread:$0]  %s15, 8192, %s17, [#allocation4], 128, 128, 8
    $region5: #{tpu_custom_call.1} parent=1 // pred_fallthru
      _
    // Predicated region
    $region6: #{tpu_custom_call.1} parent=1 // pred_check
      _
    $region7: #{tpu_custom_call.1} parent=1 // pred_check_branch
      %24 = sbr.rel (0) target = $region9
    $region8: #{tpu_custom_call.1} parent=1 // pred_region
      %26 = vsyncadd [#allocation7], 0
      %s27 = sshll.u32 %s1, 4
      %s28 = int_to_ptr.hbm [resolvable:$true] %s27
      %s29 = sshll.u32 [#allocation6], 4
      %s30 = int_to_ptr.vmem [resolvable:$true] %s29
      %35 = dma.hbm_to_vmem [thread:$0]  %s28, 2048, %s30, [#allocation7], 64, 64, 4
    $region9: #{tpu_custom_call.1} parent=1 // pred_fallthru
      _
    // Predicated region
    $region10: #{tpu_custom_call.1} parent=1 // pred_check
      _
    $region11: #{tpu_custom_call.1} parent=1 // pred_check_branch
      %37 = sbr.rel (0) target = $region13
    $region12: #{tpu_custom_call.1} parent=1 // pred_region
      %39 = dma.done [#allocation4], 8192
    $region13: #{tpu_custom_call.1} parent=1 // pred_fallthru
      _
    // Predicated region
    $region14: #{tpu_custom_call.1} parent=1 // pred_check
      _
    $region15: #{tpu_custom_call.1} parent=1 // pred_check_branch
      %41 = sbr.rel (0) target = $region17
    $region16: #{tpu_custom_call.1} parent=1 // pred_region
      %43 = dma.done [#allocation7], 2048
    $region17: #{tpu_custom_call.1} parent=1 // pred_fallthru
      _
    %p44 = scmp.eq.s32.totalorder 0, 0
    // Predicated region
    $region18: #{tpu_custom_call.1} parent=1 // pred_check
      %p45 = pneg %p44
    $region19: #{tpu_custom_call.1} parent=1 // pred_check_branch
      %47 = sbr.rel (%p45) target = $region21
    $region20: #{tpu_custom_call.1} parent=1 // pred_region
      %48 = vst [vmem:[#allocation2] sm:$0xff] 0.0
      %49 = vst [vmem:[#allocation2 + $0x8] sm:$0xff] 0.0
      %50 = vst [vmem:[#allocation2 + $0x10] sm:$0xff] 0.0
      %51 = vst [vmem:[#allocation2 + $0x18] sm:$0xff] 0.0
      %52 = vst [vmem:[#allocation2 + $0x20] sm:$0xff] 0.0
      %53 = vst [vmem:[#allocation2 + $0x28] sm:$0xff] 0.0
      %54 = vst [vmem:[#allocation2 + $0x30] sm:$0xff] 0.0
      %55 = vst [vmem:[#allocation2 + $0x38] sm:$0xff] 0.0
      %56 = vst [vmem:[#allocation2 + $0x40] sm:$0xff] 0.0
      %57 = vst [vmem:[#allocation2 + $0x48] sm:$0xff] 0.0
      %58 = vst [vmem:[#allocation2 + $0x50] sm:$0xff] 0.0
      %59 = vst [vmem:[#allocation2 + $0x58] sm:$0xff] 0.0
      %60 = vst [vmem:[#allocation2 + $0x60] sm:$0xff] 0.0
      %61 = vst [vmem:[#allocation2 + $0x68] sm:$0xff] 0.0
      %62 = vst [vmem:[#allocation2 + $0x70] sm:$0xff] 0.0
      %63 = vst [vmem:[#allocation2 + $0x78] sm:$0xff] 0.0
      %64 = vst [vmem:[#allocation2 + $0x80] sm:$0xff] 0.0
      %65 = vst [vmem:[#allocation2 + $0x88] sm:$0xff] 0.0
      %66 = vst [vmem:[#allocation2 + $0x90] sm:$0xff] 0.0
      %67 = vst [vmem:[#allocation2 + $0x98] sm:$0xff] 0.0
      %68 = vst [vmem:[#allocation2 + $0xa0] sm:$0xff] 0.0
      %69 = vst [vmem:[#allocation2 + $0xa8] sm:$0xff] 0.0
      %70 = vst [vmem:[#allocation2 + $0xb0] sm:$0xff] 0.0
      %71 = vst [vmem:[#allocation2 + $0xb8] sm:$0xff] 0.0
      %72 = vst [vmem:[#allocation2 + $0xc0] sm:$0xff] 0.0
      %73 = vst [vmem:[#allocation2 + $0xc8] sm:$0xff] 0.0
      %74 = vst [vmem:[#allocation2 + $0xd0] sm:$0xff] 0.0
      %75 = vst [vmem:[#allocation2 + $0xd8] sm:$0xff] 0.0
      %76 = vst [vmem:[#allocation2 + $0xe0] sm:$0xff] 0.0
      %77 = vst [vmem:[#allocation2 + $0xe8] sm:$0xff] 0.0
      %78 = vst [vmem:[#allocation2 + $0xf0] sm:$0xff] 0.0
      %79 = vst [vmem:[#allocation2 + $0xf8] sm:$0xff] 0.0
      %80 = vst [vmem:[#allocation2 + $0x100] sm:$0xff] 0.0
      %81 = vst [vmem:[#allocation2 + $0x108] sm:$0xff] 0.0
      %82 = vst [vmem:[#allocation2 + $0x110] sm:$0xff] 0.0
      %83 = vst [vmem:[#allocation2 + $0x118] sm:$0xff] 0.0
      %84 = vst [vmem:[#allocation2 + $0x120] sm:$0xff] 0.0
      %85 = vst [vmem:[#allocation2 + $0x128] sm:$0xff] 0.0
      %86 = vst [vmem:[#allocation2 + $0x130] sm:$0xff] 0.0
      %87 = vst [vmem:[#allocation2 + $0x138] sm:$0xff] 0.0
      %88 = vst [vmem:[#allocation2 + $0x140] sm:$0xff] 0.0
      %89 = vst [vmem:[#allocation2 + $0x148] sm:$0xff] 0.0
      %90 = vst [vmem:[#allocation2 + $0x150] sm:$0xff] 0.0
      %91 = vst [vmem:[#allocation2 + $0x158] sm:$0xff] 0.0
      %92 = vst [vmem:[#allocation2 + $0x160] sm:$0xff] 0.0
      %93 = vst [vmem:[#allocation2 + $0x168] sm:$0xff] 0.0
      %94 = vst [vmem:[#allocation2 + $0x170] sm:$0xff] 0.0
      %95 = vst [vmem:[#allocation2 + $0x178] sm:$0xff] 0.0
      %96 = vst [vmem:[#allocation2 + $0x180] sm:$0xff] 0.0
      %97 = vst [vmem:[#allocation2 + $0x188] sm:$0xff] 0.0
      %98 = vst [vmem:[#allocation2 + $0x190] sm:$0xff] 0.0
      %99 = vst [vmem:[#allocation2 + $0x198] sm:$0xff] 0.0
      %100 = vst [vmem:[#allocation2 + $0x1a0] sm:$0xff] 0.0
      %101 = vst [vmem:[#allocation2 + $0x1a8] sm:$0xff] 0.0
      %102 = vst [vmem:[#allocation2 + $0x1b0] sm:$0xff] 0.0
      %103 = vst [vmem:[#allocation2 + $0x1b8] sm:$0xff] 0.0
      %104 = vst [vmem:[#allocation2 + $0x1c0] sm:$0xff] 0.0
      %105 = vst [vmem:[#allocation2 + $0x1c8] sm:$0xff] 0.0
      %106 = vst [vmem:[#allocation2 + $0x1d0] sm:$0xff] 0.0
      %107 = vst [vmem:[#allocation2 + $0x1d8] sm:$0xff] 0.0
      %108 = vst [vmem:[#allocation2 + $0x1e0] sm:$0xff] 0.0
      %109 = vst [vmem:[#allocation2 + $0x1e8] sm:$0xff] 0.0
      %110 = vst [vmem:[#allocation2 + $0x1f0] sm:$0xff] 0.0
      %111 = vst [vmem:[#allocation2 + $0x1f8] sm:$0xff] 0.0
    $region21: #{tpu_custom_call.1} parent=1 // pred_fallthru
      _
    %v112 = vld [vmem:[#allocation2] sm:$0xff]
    %v113 = vld [vmem:[#allocation2 + $0x8] sm:$0xff]
    %v114 = vld [vmem:[#allocation2 + $0x10] sm:$0xff]
    %v115 = vld [vmem:[#allocation2 + $0x18] sm:$0xff]
    %v116 = vld [vmem:[#allocation2 + $0x20] sm:$0xff]
    %v117 = vld [vmem:[#allocation2 + $0x28] sm:$0xff]
    %v118 = vld [vmem:[#allocation2 + $0x30] sm:$0xff]
    %v119 = vld [vmem:[#allocation2 + $0x38] sm:$0xff]
    %v120 = vld [vmem:[#allocation2 + $0x40] sm:$0xff]
    %v121 = vld [vmem:[#allocation2 + $0x48] sm:$0xff]
    %v122 = vld [vmem:[#allocation2 + $0x50] sm:$0xff]
    %v123 = vld [vmem:[#allocation2 + $0x58] sm:$0xff]
    %v124 = vld [vmem:[#allocation2 + $0x60] sm:$0xff]
    %v125 = vld [vmem:[#allocation2 + $0x68] sm:$0xff]
    %v126 = vld [vmem:[#allocation2 + $0x70] sm:$0xff]
    %v127 = vld [vmem:[#allocation2 + $0x78] sm:$0xff]
    %v128 = vld [vmem:[#allocation2 + $0x80] sm:$0xff]
    %v129 = vld [vmem:[#allocation2 + $0x88] sm:$0xff]
    %v130 = vld [vmem:[#allocation2 + $0x90] sm:$0xff]
    %v131 = vld [vmem:[#allocation2 + $0x98] sm:$0xff]
    %v132 = vld [vmem:[#allocation2 + $0xa0] sm:$0xff]
    %v133 = vld [vmem:[#allocation2 + $0xa8] sm:$0xff]
    %v134 = vld [vmem:[#allocation2 + $0xb0] sm:$0xff]
    %v135 = vld [vmem:[#allocation2 + $0xb8] sm:$0xff]
    %v136 = vld [vmem:[#allocation2 + $0xc0] sm:$0xff]
    %v137 = vld [vmem:[#allocation2 + $0xc8] sm:$0xff]
    %v138 = vld [vmem:[#allocation2 + $0xd0] sm:$0xff]
    %v139 = vld [vmem:[#allocation2 + $0xd8] sm:$0xff]
    %v140 = vld [vmem:[#allocation2 + $0xe0] sm:$0xff]
    %v141 = vld [vmem:[#allocation2 + $0xe8] sm:$0xff]
    %v142 = vld [vmem:[#allocation2 + $0xf0] sm:$0xff]
    %v143 = vld [vmem:[#allocation2 + $0xf8] sm:$0xff]
    %v144 = vld [vmem:[#allocation2 + $0x100] sm:$0xff]
    %v145 = vld [vmem:[#allocation2 + $0x108] sm:$0xff]
    %v146 = vld [vmem:[#allocation2 + $0x110] sm:$0xff]
    %v147 = vld [vmem:[#allocation2 + $0x118] sm:$0xff]
    %v148 = vld [vmem:[#allocation2 + $0x120] sm:$0xff]
    %v149 = vld [vmem:[#allocation2 + $0x128] sm:$0xff]
    %v150 = vld [vmem:[#allocation2 + $0x130] sm:$0xff]
    %v151 = vld [vmem:[#allocation2 + $0x138] sm:$0xff]
    %v152 = vld [vmem:[#allocation2 + $0x140] sm:$0xff]
    %v153 = vld [vmem:[#allocation2 + $0x148] sm:$0xff]
    %v154 = vld [vmem:[#allocation2 + $0x150] sm:$0xff]
    %v155 = vld [vmem:[#allocation2 + $0x158] sm:$0xff]
    %v156 = vld [vmem:[#allocation2 + $0x160] sm:$0xff]
    %v157 = vld [vmem:[#allocation2 + $0x168] sm:$0xff]
    %v158 = vld [vmem:[#allocation2 + $0x170] sm:$0xff]
    %v159 = vld [vmem:[#allocation2 + $0x178] sm:$0xff]
    %v160 = vld [vmem:[#allocation2 + $0x180] sm:$0xff]
    %v161 = vld [vmem:[#allocation2 + $0x188] sm:$0xff]
    %v162 = vld [vmem:[#allocation2 + $0x190] sm:$0xff]
    %v163 = vld [vmem:[#allocation2 + $0x198] sm:$0xff]
    %v164 = vld [vmem:[#allocation2 + $0x1a0] sm:$0xff]
    %v165 = vld [vmem:[#allocation2 + $0x1a8] sm:$0xff]
    %v166 = vld [vmem:[#allocation2 + $0x1b0] sm:$0xff]
    %v167 = vld [vmem:[#allocation2 + $0x1b8] sm:$0xff]
    %v168 = vld [vmem:[#allocation2 + $0x1c0] sm:$0xff]
    %v169 = vld [vmem:[#allocation2 + $0x1c8] sm:$0xff]
    %v170 = vld [vmem:[#allocation2 + $0x1d0] sm:$0xff]
    %v171 = vld [vmem:[#allocation2 + $0x1d8] sm:$0xff]
    %v172 = vld [vmem:[#allocation2 + $0x1e0] sm:$0xff]
    %v173 = vld [vmem:[#allocation2 + $0x1e8] sm:$0xff]
    %v174 = vld [vmem:[#allocation2 + $0x1f0] sm:$0xff]
    %v175 = vld [vmem:[#allocation2 + $0x1f8] sm:$0xff]
    %v176 = vld [vmem:[#allocation3] sm:$0xff]
    %v177 = vld [vmem:[#allocation3 + $0x8] sm:$0xff]
    %v178 = vld [vmem:[#allocation3 + $0x10] sm:$0xff]
    %v179 = vld [vmem:[#allocation3 + $0x18] sm:$0xff]
    %v180 = vld [vmem:[#allocation3 + $0x20] sm:$0xff]
    %v181 = vld [vmem:[#allocation3 + $0x28] sm:$0xff]
    %v182 = vld [vmem:[#allocation3 + $0x30] sm:$0xff]
    %v183 = vld [vmem:[#allocation3 + $0x38] sm:$0xff]
    %v184 = vld [vmem:[#allocation3 + $0x40] sm:$0xff]
    %v185 = vld [vmem:[#allocation3 + $0x48] sm:$0xff]
    %v186 = vld [vmem:[#allocation3 + $0x50] sm:$0xff]
    %v187 = vld [vmem:[#allocation3 + $0x58] sm:$0xff]
    %v188 = vld [vmem:[#allocation3 + $0x60] sm:$0xff]
    %v189 = vld [vmem:[#allocation3 + $0x68] sm:$0xff]
    %v190 = vld [vmem:[#allocation3 + $0x70] sm:$0xff]
    %v191 = vld [vmem:[#allocation3 + $0x78] sm:$0xff]
    %v192 = vld [vmem:[#allocation3 + $0x80] sm:$0xff]
    %v193 = vld [vmem:[#allocation3 + $0x88] sm:$0xff]
    %v194 = vld [vmem:[#allocation3 + $0x90] sm:$0xff]
    %v195 = vld [vmem:[#allocation3 + $0x98] sm:$0xff]
    %v196 = vld [vmem:[#allocation3 + $0xa0] sm:$0xff]
    %v197 = vld [vmem:[#allocation3 + $0xa8] sm:$0xff]
    %v198 = vld [vmem:[#allocation3 + $0xb0] sm:$0xff]
    %v199 = vld [vmem:[#allocation3 + $0xb8] sm:$0xff]
    %v200 = vld [vmem:[#allocation3 + $0xc0] sm:$0xff]
    %v201 = vld [vmem:[#allocation3 + $0xc8] sm:$0xff]
    %v202 = vld [vmem:[#allocation3 + $0xd0] sm:$0xff]
    %v203 = vld [vmem:[#allocation3 + $0xd8] sm:$0xff]
    %v204 = vld [vmem:[#allocation3 + $0xe0] sm:$0xff]
    %v205 = vld [vmem:[#allocation3 + $0xe8] sm:$0xff]
    %v206 = vld [vmem:[#allocation3 + $0xf0] sm:$0xff]
    %v207 = vld [vmem:[#allocation3 + $0xf8] sm:$0xff]
    %v208 = vld [vmem:[#allocation3 + $0x100] sm:$0xff]
    %v209 = vld [vmem:[#allocation3 + $0x108] sm:$0xff]
    %v210 = vld [vmem:[#allocation3 + $0x110] sm:$0xff]
    %v211 = vld [vmem:[#allocation3 + $0x118] sm:$0xff]
    %v212 = vld [vmem:[#allocation3 + $0x120] sm:$0xff]
    %v213 = vld [vmem:[#allocation3 + $0x128] sm:$0xff]
    %v214 = vld [vmem:[#allocation3 + $0x130] sm:$0xff]
    %v215 = vld [vmem:[#allocation3 + $0x138] sm:$0xff]
    %v216 = vld [vmem:[#allocation3 + $0x140] sm:$0xff]
    %v217 = vld [vmem:[#allocation3 + $0x148] sm:$0xff]
    %v218 = vld [vmem:[#allocation3 + $0x150] sm:$0xff]
    %v219 = vld [vmem:[#allocation3 + $0x158] sm:$0xff]
    %v220 = vld [vmem:[#allocation3 + $0x160] sm:$0xff]
    %v221 = vld [vmem:[#allocation3 + $0x168] sm:$0xff]
    %v222 = vld [vmem:[#allocation3 + $0x170] sm:$0xff]
    %v223 = vld [vmem:[#allocation3 + $0x178] sm:$0xff]
    %v224 = vld [vmem:[#allocation3 + $0x180] sm:$0xff]
    %v225 = vld [vmem:[#allocation3 + $0x188] sm:$0xff]
    %v226 = vld [vmem:[#allocation3 + $0x190] sm:$0xff]
    %v227 = vld [vmem:[#allocation3 + $0x198] sm:$0xff]
    %v228 = vld [vmem:[#allocation3 + $0x1a0] sm:$0xff]
    %v229 = vld [vmem:[#allocation3 + $0x1a8] sm:$0xff]
    %v230 = vld [vmem:[#allocation3 + $0x1b0] sm:$0xff]
    %v231 = vld [vmem:[#allocation3 + $0x1b8] sm:$0xff]
    %v232 = vld [vmem:[#allocation3 + $0x1c0] sm:$0xff]
    %v233 = vld [vmem:[#allocation3 + $0x1c8] sm:$0xff]
    %v234 = vld [vmem:[#allocation3 + $0x1d0] sm:$0xff]
    %v235 = vld [vmem:[#allocation3 + $0x1d8] sm:$0xff]
    %v236 = vld [vmem:[#allocation3 + $0x1e0] sm:$0xff]
    %v237 = vld [vmem:[#allocation3 + $0x1e8] sm:$0xff]
    %v238 = vld [vmem:[#allocation3 + $0x1f0] sm:$0xff]
    %v239 = vld [vmem:[#allocation3 + $0x1f8] sm:$0xff]
    %v240 = vld [vmem:[#allocation6] sm:$0xf]
    %v241 = vld [vmem:[#allocation6 + $0x4] sm:$0xf]
    %v242 = vld [vmem:[#allocation6 + $0x8] sm:$0xf]
    %v243 = vld [vmem:[#allocation6 + $0xc] sm:$0xf]
    %v244 = vld [vmem:[#allocation6 + $0x10] sm:$0xf]
    %v245 = vld [vmem:[#allocation6 + $0x14] sm:$0xf]
    %v246 = vld [vmem:[#allocation6 + $0x18] sm:$0xf]
    %v247 = vld [vmem:[#allocation6 + $0x1c] sm:$0xf]
    %v248 = vld [vmem:[#allocation6 + $0x20] sm:$0xf]
    %v249 = vld [vmem:[#allocation6 + $0x24] sm:$0xf]
    %v250 = vld [vmem:[#allocation6 + $0x28] sm:$0xf]
    %v251 = vld [vmem:[#allocation6 + $0x2c] sm:$0xf]
    %v252 = vld [vmem:[#allocation6 + $0x30] sm:$0xf]
    %v253 = vld [vmem:[#allocation6 + $0x34] sm:$0xf]
    %v254 = vld [vmem:[#allocation6 + $0x38] sm:$0xf]
    %v255 = vld [vmem:[#allocation6 + $0x3c] sm:$0xf]
    %v256 = vld [vmem:[#allocation6 + $0x40] sm:$0xf]
    %v257 = vld [vmem:[#allocation6 + $0x44] sm:$0xf]
    %v258 = vld [vmem:[#allocation6 + $0x48] sm:$0xf]
    %v259 = vld [vmem:[#allocation6 + $0x4c] sm:$0xf]
    %v260 = vld [vmem:[#allocation6 + $0x50] sm:$0xf]
    %v261 = vld [vmem:[#allocation6 + $0x54] sm:$0xf]
    %v262 = vld [vmem:[#allocation6 + $0x58] sm:$0xf]
    %v263 = vld [vmem:[#allocation6 + $0x5c] sm:$0xf]
    %v264 = vld [vmem:[#allocation6 + $0x60] sm:$0xf]
    %v265 = vld [vmem:[#allocation6 + $0x64] sm:$0xf]
    %v266 = vld [vmem:[#allocation6 + $0x68] sm:$0xf]
    %v267 = vld [vmem:[#allocation6 + $0x6c] sm:$0xf]
    %v268 = vld [vmem:[#allocation6 + $0x70] sm:$0xf]
    %v269 = vld [vmem:[#allocation6 + $0x74] sm:$0xf]
    %v270 = vld [vmem:[#allocation6 + $0x78] sm:$0xf]
    %v271 = vld [vmem:[#allocation6 + $0x7c] sm:$0xf]
    %v336 = vunpack.c.l.b16 %v176
    %v337 = vunpack.c.h.b16 %v176
    %v338 = vunpack.c.l.b16 %v177
    %v339 = vunpack.c.h.b16 %v177
    %v340 = vunpack.c.l.b16 %v178
    %v341 = vunpack.c.h.b16 %v178
    %v342 = vunpack.c.l.b16 %v179
    %v343 = vunpack.c.h.b16 %v179
    %v344 = vunpack.c.l.b16 %v180
    %v345 = vunpack.c.h.b16 %v180
    %v346 = vunpack.c.l.b16 %v181
    %v347 = vunpack.c.h.b16 %v181
    %v348 = vunpack.c.l.b16 %v182
    %v349 = vunpack.c.h.b16 %v182
    %v350 = vunpack.c.l.b16 %v183
    %v351 = vunpack.c.h.b16 %v183
    %v352 = vunpack.c.l.b16 %v184
    %v353 = vunpack.c.h.b16 %v184
    %v354 = vunpack.c.l.b16 %v185
    %v355 = vunpack.c.h.b16 %v185
    %v356 = vunpack.c.l.b16 %v186
    %v357 = vunpack.c.h.b16 %v186
    %v358 = vunpack.c.l.b16 %v187
    %v359 = vunpack.c.h.b16 %v187
    %v360 = vunpack.c.l.b16 %v188
    %v361 = vunpack.c.h.b16 %v188
    %v362 = vunpack.c.l.b16 %v189
    %v363 = vunpack.c.h.b16 %v189
    %v364 = vunpack.c.l.b16 %v190
    %v365 = vunpack.c.h.b16 %v190
    %v366 = vunpack.c.l.b16 %v191
    %v367 = vunpack.c.h.b16 %v191
    %v368 = vunpack.c.l.b16 %v192
    %v369 = vunpack.c.h.b16 %v192
    %v370 = vunpack.c.l.b16 %v193
    %v371 = vunpack.c.h.b16 %v193
    %v372 = vunpack.c.l.b16 %v194
    %v373 = vunpack.c.h.b16 %v194
    %v374 = vunpack.c.l.b16 %v195
    %v375 = vunpack.c.h.b16 %v195
    %v376 = vunpack.c.l.b16 %v196
    %v377 = vunpack.c.h.b16 %v196
    %v378 = vunpack.c.l.b16 %v197
    %v379 = vunpack.c.h.b16 %v197
    %v380 = vunpack.c.l.b16 %v198
    %v381 = vunpack.c.h.b16 %v198
    %v382 = vunpack.c.l.b16 %v199
    %v383 = vunpack.c.h.b16 %v199
    %v384 = vunpack.c.l.b16 %v200
    %v385 = vunpack.c.h.b16 %v200
    %v386 = vunpack.c.l.b16 %v201
    %v387 = vunpack.c.h.b16 %v201
    %v388 = vunpack.c.l.b16 %v202
    %v389 = vunpack.c.h.b16 %v202
    %v390 = vunpack.c.l.b16 %v203
    %v391 = vunpack.c.h.b16 %v203
    %v392 = vunpack.c.l.b16 %v204
    %v393 = vunpack.c.h.b16 %v204
    %v394 = vunpack.c.l.b16 %v205
    %v395 = vunpack.c.h.b16 %v205
    %v396 = vunpack.c.l.b16 %v206
    %v397 = vunpack.c.h.b16 %v206
    %v398 = vunpack.c.l.b16 %v207
    %v399 = vunpack.c.h.b16 %v207
    %v400 = vunpack.c.l.b16 %v208
    %v401 = vunpack.c.h.b16 %v208
    %v402 = vunpack.c.l.b16 %v209
    %v403 = vunpack.c.h.b16 %v209
    %v404 = vunpack.c.l.b16 %v210
    %v405 = vunpack.c.h.b16 %v210
    %v406 = vunpack.c.l.b16 %v211
    %v407 = vunpack.c.h.b16 %v211
    %v408 = vunpack.c.l.b16 %v212
    %v409 = vunpack.c.h.b16 %v212
    %v410 = vunpack.c.l.b16 %v213
    %v411 = vunpack.c.h.b16 %v213
    %v412 = vunpack.c.l.b16 %v214
    %v413 = vunpack.c.h.b16 %v214
    %v414 = vunpack.c.l.b16 %v215
    %v415 = vunpack.c.h.b16 %v215
    %v416 = vunpack.c.l.b16 %v216
    %v417 = vunpack.c.h.b16 %v216
    %v418 = vunpack.c.l.b16 %v217
    %v419 = vunpack.c.h.b16 %v217
    %v420 = vunpack.c.l.b16 %v218
    %v421 = vunpack.c.h.b16 %v218
    %v422 = vunpack.c.l.b16 %v219
    %v423 = vunpack.c.h.b16 %v219
    %v424 = vunpack.c.l.b16 %v220
    %v425 = vunpack.c.h.b16 %v220
    %v426 = vunpack.c.l.b16 %v221
    %v427 = vunpack.c.h.b16 %v221
    %v428 = vunpack.c.l.b16 %v222
    %v429 = vunpack.c.h.b16 %v222
    %v430 = vunpack.c.l.b16 %v223
    %v431 = vunpack.c.h.b16 %v223
    %v432 = vunpack.c.l.b16 %v224
    %v433 = vunpack.c.h.b16 %v224
    %v434 = vunpack.c.l.b16 %v225
    %v435 = vunpack.c.h.b16 %v225
    %v436 = vunpack.c.l.b16 %v226
    %v437 = vunpack.c.h.b16 %v226
    %v438 = vunpack.c.l.b16 %v227
    %v439 = vunpack.c.h.b16 %v227
    %v440 = vunpack.c.l.b16 %v228
    %v441 = vunpack.c.h.b16 %v228
    %v442 = vunpack.c.l.b16 %v229
    %v443 = vunpack.c.h.b16 %v229
    %v444 = vunpack.c.l.b16 %v230
    %v445 = vunpack.c.h.b16 %v230
    %v446 = vunpack.c.l.b16 %v231
    %v447 = vunpack.c.h.b16 %v231
    %v448 = vunpack.c.l.b16 %v232
    %v449 = vunpack.c.h.b16 %v232
    %v450 = vunpack.c.l.b16 %v233
    %v451 = vunpack.c.h.b16 %v233
    %v452 = vunpack.c.l.b16 %v234
    %v453 = vunpack.c.h.b16 %v234
    %v454 = vunpack.c.l.b16 %v235
    %v455 = vunpack.c.h.b16 %v235
    %v456 = vunpack.c.l.b16 %v236
    %v457 = vunpack.c.h.b16 %v236
    %v458 = vunpack.c.l.b16 %v237
    %v459 = vunpack.c.h.b16 %v237
    %v460 = vunpack.c.l.b16 %v238
    %v461 = vunpack.c.h.b16 %v238
    %v462 = vunpack.c.l.b16 %v239
    %v463 = vunpack.c.h.b16 %v239
    %v464 = vpack.c.b16 %v338, %v336
    %v465 = vpack.c.b16 %v339, %v337
    %v466 = vpack.c.b16 %v342, %v340
    %v467 = vpack.c.b16 %v343, %v341
    %v468 = vpack.c.b16 %v346, %v344
    %v469 = vpack.c.b16 %v347, %v345
    %v470 = vpack.c.b16 %v350, %v348
    %v471 = vpack.c.b16 %v351, %v349
    %v472 = vpack.c.b16 %v354, %v352
    %v473 = vpack.c.b16 %v355, %v353
    %v474 = vpack.c.b16 %v358, %v356
    %v475 = vpack.c.b16 %v359, %v357
    %v476 = vpack.c.b16 %v362, %v360
    %v477 = vpack.c.b16 %v363, %v361
    %v478 = vpack.c.b16 %v366, %v364
    %v479 = vpack.c.b16 %v367, %v365
    %v480 = vpack.c.b16 %v370, %v368
    %v481 = vpack.c.b16 %v371, %v369
    %v482 = vpack.c.b16 %v374, %v372
    %v483 = vpack.c.b16 %v375, %v373
    %v484 = vpack.c.b16 %v378, %v376
    %v485 = vpack.c.b16 %v379, %v377
    %v486 = vpack.c.b16 %v382, %v380
    %v487 = vpack.c.b16 %v383, %v381
    %v488 = vpack.c.b16 %v386, %v384
    %v489 = vpack.c.b16 %v387, %v385
    %v490 = vpack.c.b16 %v390, %v388
    %v491 = vpack.c.b16 %v391, %v389
    %v492 = vpack.c.b16 %v394, %v392
    %v493 = vpack.c.b16 %v395, %v393
    %v494 = vpack.c.b16 %v398, %v396
    %v495 = vpack.c.b16 %v399, %v397
    %v496 = vpack.c.b16 %v402, %v400
    %v497 = vpack.c.b16 %v403, %v401
    %v498 = vpack.c.b16 %v406, %v404
    %v499 = vpack.c.b16 %v407, %v405
    %v500 = vpack.c.b16 %v410, %v408
    %v501 = vpack.c.b16 %v411, %v409
    %v502 = vpack.c.b16 %v414, %v412
    %v503 = vpack.c.b16 %v415, %v413
    %v504 = vpack.c.b16 %v418, %v416
    %v505 = vpack.c.b16 %v419, %v417
    %v506 = vpack.c.b16 %v422, %v420
    %v507 = vpack.c.b16 %v423, %v421
    %v508 = vpack.c.b16 %v426, %v424
    %v509 = vpack.c.b16 %v427, %v425
    %v510 = vpack.c.b16 %v430, %v428
    %v511 = vpack.c.b16 %v431, %v429
    %v512 = vpack.c.b16 %v434, %v432
    %v513 = vpack.c.b16 %v435, %v433
    %v514 = vpack.c.b16 %v438, %v436
    %v515 = vpack.c.b16 %v439, %v437
    %v516 = vpack.c.b16 %v442, %v440
    %v517 = vpack.c.b16 %v443, %v441
    %v518 = vpack.c.b16 %v446, %v444
    %v519 = vpack.c.b16 %v447, %v445
    %v520 = vpack.c.b16 %v450, %v448
    %v521 = vpack.c.b16 %v451, %v449
    %v522 = vpack.c.b16 %v454, %v452
    %v523 = vpack.c.b16 %v455, %v453
    %v524 = vpack.c.b16 %v458, %v456
    %v525 = vpack.c.b16 %v459, %v457
    %v526 = vpack.c.b16 %v462, %v460
    %v527 = vpack.c.b16 %v463, %v461
    %v624 = vunpack.c.l.b16 %v240
    %v625 = vunpack.c.l.b16 %v241
    %v626 = vunpack.c.l.b16 %v242
    %v627 = vunpack.c.l.b16 %v243
    %v628 = vunpack.c.l.b16 %v244
    %v629 = vunpack.c.l.b16 %v245
    %v630 = vunpack.c.l.b16 %v246
    %v631 = vunpack.c.l.b16 %v247
    %v632 = vunpack.c.l.b16 %v248
    %v633 = vunpack.c.l.b16 %v249
    %v634 = vunpack.c.l.b16 %v250
    %v635 = vunpack.c.l.b16 %v251
    %v636 = vunpack.c.l.b16 %v252
    %v637 = vunpack.c.l.b16 %v253
    %v638 = vunpack.c.l.b16 %v254
    %v639 = vunpack.c.l.b16 %v255
    %v640 = vunpack.c.l.b16 %v256
    %v641 = vunpack.c.l.b16 %v257
    %v642 = vunpack.c.l.b16 %v258
    %v643 = vunpack.c.l.b16 %v259
    %v644 = vunpack.c.l.b16 %v260
    %v645 = vunpack.c.l.b16 %v261
    %v646 = vunpack.c.l.b16 %v262
    %v647 = vunpack.c.l.b16 %v263
    %v648 = vunpack.c.l.b16 %v264
    %v649 = vunpack.c.l.b16 %v265
    %v650 = vunpack.c.l.b16 %v266
    %v651 = vunpack.c.l.b16 %v267
    %v652 = vunpack.c.l.b16 %v268
    %v653 = vunpack.c.l.b16 %v269
    %v654 = vunpack.c.l.b16 %v270
    %v655 = vunpack.c.l.b16 %v271
    %v656 = vpack.c.b16 %v625, %v624
    %v657 = vpack.c.b16 %v627, %v626
    %v658 = vpack.c.b16 %v629, %v628
    %v659 = vpack.c.b16 %v631, %v630
    %v660 = vpack.c.b16 %v633, %v632
    %v661 = vpack.c.b16 %v635, %v634
    %v662 = vpack.c.b16 %v637, %v636
    %v663 = vpack.c.b16 %v639, %v638
    %v664 = vpack.c.b16 %v641, %v640
    %v665 = vpack.c.b16 %v643, %v642
    %v666 = vpack.c.b16 %v645, %v644
    %v667 = vpack.c.b16 %v647, %v646
    %v668 = vpack.c.b16 %v649, %v648
    %v669 = vpack.c.b16 %v651, %v650
    %v670 = vpack.c.b16 %v653, %v652
    %v671 = vpack.c.b16 %v655, %v654
    %688 = vmatpush.bf16.msra.mxu0 %v663
    %689 = vmatpush.bf16.msra.mxu0 %v662
    %690 = vmatpush.bf16.msra.mxu0 %v661
    %691 = vmatpush.bf16.msra.mxu0 %v660
    %692 = vmatpush.bf16.msra.mxu0 %v659
    %693 = vmatpush.bf16.msra.mxu0 %v658
    %694 = vmatpush.bf16.msra.mxu0 %v657
    %695 = vmatpush.bf16.msra.mxu0 %v656
    %696 = vmatmul.bf16.gmra.mxu0 %v464
    %v697 = vpop.f32.mrf.mxu0
    %v698 = vadd.f32 0.0, %v697
    %v699 = vpop.f32.mrf.mxu0
    %v700 = vadd.f32 0.0, %v699
    %701 = vmatmul.bf16.gmra.mxu0 %v466
    %v702 = vpop.f32.mrf.mxu0
    %v703 = vadd.f32 0.0, %v702
    %v704 = vpop.f32.mrf.mxu0
    %v705 = vadd.f32 0.0, %v704
    %706 = vmatmul.bf16.gmra.mxu0 %v468
    %v707 = vpop.f32.mrf.mxu0
    %v708 = vadd.f32 0.0, %v707
    %v709 = vpop.f32.mrf.mxu0
    %v710 = vadd.f32 0.0, %v709
    %711 = vmatmul.bf16.gmra.mxu0 %v470
    %v712 = vpop.f32.mrf.mxu0
    %v713 = vadd.f32 0.0, %v712
    %v714 = vpop.f32.mrf.mxu0
    %v715 = vadd.f32 0.0, %v714
    %716 = vmatmul.bf16.gmra.mxu0 %v472
    %v717 = vpop.f32.mrf.mxu0
    %v718 = vadd.f32 0.0, %v717
    %v719 = vpop.f32.mrf.mxu0
    %v720 = vadd.f32 0.0, %v719
    %721 = vmatmul.bf16.gmra.mxu0 %v474
    %v722 = vpop.f32.mrf.mxu0
    %v723 = vadd.f32 0.0, %v722
    %v724 = vpop.f32.mrf.mxu0
    %v725 = vadd.f32 0.0, %v724
    %726 = vmatmul.bf16.gmra.mxu0 %v476
    %v727 = vpop.f32.mrf.mxu0
    %v728 = vadd.f32 0.0, %v727
    %v729 = vpop.f32.mrf.mxu0
    %v730 = vadd.f32 0.0, %v729
    %731 = vmatmul.bf16.gmra.mxu0 %v478
    %v732 = vpop.f32.mrf.mxu0
    %v733 = vadd.f32 0.0, %v732
    %v734 = vpop.f32.mrf.mxu0
    %v735 = vadd.f32 0.0, %v734
    %736 = vmatmul.bf16.gmra.mxu0 %v480
    %v737 = vpop.f32.mrf.mxu0
    %v738 = vadd.f32 0.0, %v737
    %v739 = vpop.f32.mrf.mxu0
    %v740 = vadd.f32 0.0, %v739
    %741 = vmatmul.bf16.gmra.mxu0 %v482
    %v742 = vpop.f32.mrf.mxu0
    %v743 = vadd.f32 0.0, %v742
    %v744 = vpop.f32.mrf.mxu0
    %v745 = vadd.f32 0.0, %v744
    %746 = vmatmul.bf16.gmra.mxu0 %v484
    %v747 = vpop.f32.mrf.mxu0
    %v748 = vadd.f32 0.0, %v747
    %v749 = vpop.f32.mrf.mxu0
    %v750 = vadd.f32 0.0, %v749
    %751 = vmatmul.bf16.gmra.mxu0 %v486
    %v752 = vpop.f32.mrf.mxu0
    %v753 = vadd.f32 0.0, %v752
    %v754 = vpop.f32.mrf.mxu0
    %v755 = vadd.f32 0.0, %v754
    %756 = vmatmul.bf16.gmra.mxu0 %v488
    %v757 = vpop.f32.mrf.mxu0
    %v758 = vadd.f32 0.0, %v757
    %v759 = vpop.f32.mrf.mxu0
    %v760 = vadd.f32 0.0, %v759
    %761 = vmatmul.bf16.gmra.mxu0 %v490
    %v762 = vpop.f32.mrf.mxu0
    %v763 = vadd.f32 0.0, %v762
    %v764 = vpop.f32.mrf.mxu0
    %v765 = vadd.f32 0.0, %v764
    %766 = vmatmul.bf16.gmra.mxu0 %v492
    %v767 = vpop.f32.mrf.mxu0
    %v768 = vadd.f32 0.0, %v767
    %v769 = vpop.f32.mrf.mxu0
    %v770 = vadd.f32 0.0, %v769
    %771 = vmatmul.bf16.gmra.mxu0 %v494
    %v772 = vpop.f32.mrf.mxu0
    %v773 = vadd.f32 0.0, %v772
    %v774 = vpop.f32.mrf.mxu0
    %v775 = vadd.f32 0.0, %v774
    %776 = vmatmul.bf16.gmra.mxu0 %v496
    %v777 = vpop.f32.mrf.mxu0
    %v778 = vadd.f32 0.0, %v777
    %v779 = vpop.f32.mrf.mxu0
    %v780 = vadd.f32 0.0, %v779
    %781 = vmatmul.bf16.gmra.mxu0 %v498
    %v782 = vpop.f32.mrf.mxu0
    %v783 = vadd.f32 0.0, %v782
    %v784 = vpop.f32.mrf.mxu0
    %v785 = vadd.f32 0.0, %v784
    %786 = vmatmul.bf16.gmra.mxu0 %v500
    %v787 = vpop.f32.mrf.mxu0
    %v788 = vadd.f32 0.0, %v787
    %v789 = vpop.f32.mrf.mxu0
    %v790 = vadd.f32 0.0, %v789
    %791 = vmatmul.bf16.gmra.mxu0 %v502
    %v792 = vpop.f32.mrf.mxu0
    %v793 = vadd.f32 0.0, %v792
    %v794 = vpop.f32.mrf.mxu0
    %v795 = vadd.f32 0.0, %v794
    %796 = vmatmul.bf16.gmra.mxu0 %v504
    %v797 = vpop.f32.mrf.mxu0
    %v798 = vadd.f32 0.0, %v797
    %v799 = vpop.f32.mrf.mxu0
    %v800 = vadd.f32 0.0, %v799
    %801 = vmatmul.bf16.gmra.mxu0 %v506
    %v802 = vpop.f32.mrf.mxu0
    %v803 = vadd.f32 0.0, %v802
    %v804 = vpop.f32.mrf.mxu0
    %v805 = vadd.f32 0.0, %v804
    %806 = vmatmul.bf16.gmra.mxu0 %v508
    %v807 = vpop.f32.mrf.mxu0
    %v808 = vadd.f32 0.0, %v807
    %v809 = vpop.f32.mrf.mxu0
    %v810 = vadd.f32 0.0, %v809
    %811 = vmatmul.bf16.gmra.mxu0 %v510
    %v812 = vpop.f32.mrf.mxu0
    %v813 = vadd.f32 0.0, %v812
    %v814 = vpop.f32.mrf.mxu0
    %v815 = vadd.f32 0.0, %v814
    %816 = vmatmul.bf16.gmra.mxu0 %v512
    %v817 = vpop.f32.mrf.mxu0
    %v818 = vadd.f32 0.0, %v817
    %v819 = vpop.f32.mrf.mxu0
    %v820 = vadd.f32 0.0, %v819
    %821 = vmatmul.bf16.gmra.mxu0 %v514
    %v822 = vpop.f32.mrf.mxu0
    %v823 = vadd.f32 0.0, %v822
    %v824 = vpop.f32.mrf.mxu0
    %v825 = vadd.f32 0.0, %v824
    %826 = vmatmul.bf16.gmra.mxu0 %v516
    %v827 = vpop.f32.mrf.mxu0
    %v828 = vadd.f32 0.0, %v827
    %v829 = vpop.f32.mrf.mxu0
    %v830 = vadd.f32 0.0, %v829
    %831 = vmatmul.bf16.gmra.mxu0 %v518
    %v832 = vpop.f32.mrf.mxu0
    %v833 = vadd.f32 0.0, %v832
    %v834 = vpop.f32.mrf.mxu0
    %v835 = vadd.f32 0.0, %v834
    %836 = vmatmul.bf16.gmra.mxu0 %v520
    %v837 = vpop.f32.mrf.mxu0
    %v838 = vadd.f32 0.0, %v837
    %v839 = vpop.f32.mrf.mxu0
    %v840 = vadd.f32 0.0, %v839
    %841 = vmatmul.bf16.gmra.mxu0 %v522
    %v842 = vpop.f32.mrf.mxu0
    %v843 = vadd.f32 0.0, %v842
    %v844 = vpop.f32.mrf.mxu0
    %v845 = vadd.f32 0.0, %v844
    %846 = vmatmul.bf16.gmra.mxu0 %v524
    %v847 = vpop.f32.mrf.mxu0
    %v848 = vadd.f32 0.0, %v847
    %v849 = vpop.f32.mrf.mxu0
    %v850 = vadd.f32 0.0, %v849
    %851 = vmatmul.bf16.gmra.mxu0 %v526
    %v852 = vpop.f32.mrf.mxu0
    %v853 = vadd.f32 0.0, %v852
    %v854 = vpop.f32.mrf.mxu0
    %v855 = vadd.f32 0.0, %v854
    %856 = vdwg.mxu0
    %857 = vmatpush.bf16.msra.mxu0 %v671
    %858 = vmatpush.bf16.msra.mxu0 %v670
    %859 = vmatpush.bf16.msra.mxu0 %v669
    %860 = vmatpush.bf16.msra.mxu0 %v668
    %861 = vmatpush.bf16.msra.mxu0 %v667
    %862 = vmatpush.bf16.msra.mxu0 %v666
    %863 = vmatpush.bf16.msra.mxu0 %v665
    %864 = vmatpush.bf16.msra.mxu0 %v664
    %865 = vmatmul.bf16.gmra.mxu0 %v465
    %v866 = vpop.f32.mrf.mxu0
    %v867 = vadd.f32 %v698, %v866
    %v868 = vpop.f32.mrf.mxu0
    %v869 = vadd.f32 %v700, %v868
    %870 = vmatmul.bf16.gmra.mxu0 %v467
    %v871 = vpop.f32.mrf.mxu0
    %v872 = vadd.f32 %v703, %v871
    %v873 = vpop.f32.mrf.mxu0
    %v874 = vadd.f32 %v705, %v873
    %875 = vmatmul.bf16.gmra.mxu0 %v469
    %v876 = vpop.f32.mrf.mxu0
    %v877 = vadd.f32 %v708, %v876
    %v878 = vpop.f32.mrf.mxu0
    %v879 = vadd.f32 %v710, %v878
    %880 = vmatmul.bf16.gmra.mxu0 %v471
    %v881 = vpop.f32.mrf.mxu0
    %v882 = vadd.f32 %v713, %v881
    %v883 = vpop.f32.mrf.mxu0
    %v884 = vadd.f32 %v715, %v883
    %885 = vmatmul.bf16.gmra.mxu0 %v473
    %v886 = vpop.f32.mrf.mxu0
    %v887 = vadd.f32 %v718, %v886
    %v888 = vpop.f32.mrf.mxu0
    %v889 = vadd.f32 %v720, %v888
    %890 = vmatmul.bf16.gmra.mxu0 %v475
    %v891 = vpop.f32.mrf.mxu0
    %v892 = vadd.f32 %v723, %v891
    %v893 = vpop.f32.mrf.mxu0
    %v894 = vadd.f32 %v725, %v893
    %895 = vmatmul.bf16.gmra.mxu0 %v477
    %v896 = vpop.f32.mrf.mxu0
    %v897 = vadd.f32 %v728, %v896
    %v898 = vpop.f32.mrf.mxu0
    %v899 = vadd.f32 %v730, %v898
    %900 = vmatmul.bf16.gmra.mxu0 %v479
    %v901 = vpop.f32.mrf.mxu0
    %v902 = vadd.f32 %v733, %v901
    %v903 = vpop.f32.mrf.mxu0
    %v904 = vadd.f32 %v735, %v903
    %905 = vmatmul.bf16.gmra.mxu0 %v481
    %v906 = vpop.f32.mrf.mxu0
    %v907 = vadd.f32 %v738, %v906
    %v908 = vpop.f32.mrf.mxu0
    %v909 = vadd.f32 %v740, %v908
    %910 = vmatmul.bf16.gmra.mxu0 %v483
    %v911 = vpop.f32.mrf.mxu0
    %v912 = vadd.f32 %v743, %v911
    %v913 = vpop.f32.mrf.mxu0
    %v914 = vadd.f32 %v745, %v913
    %915 = vmatmul.bf16.gmra.mxu0 %v485
    %v916 = vpop.f32.mrf.mxu0
    %v917 = vadd.f32 %v748, %v916
    %v918 = vpop.f32.mrf.mxu0
    %v919 = vadd.f32 %v750, %v918
    %920 = vmatmul.bf16.gmra.mxu0 %v487
    %v921 = vpop.f32.mrf.mxu0
    %v922 = vadd.f32 %v753, %v921
    %v923 = vpop.f32.mrf.mxu0
    %v924 = vadd.f32 %v755, %v923
    %925 = vmatmul.bf16.gmra.mxu0 %v489
    %v926 = vpop.f32.mrf.mxu0
    %v927 = vadd.f32 %v758, %v926
    %v928 = vpop.f32.mrf.mxu0
    %v929 = vadd.f32 %v760, %v928
    %930 = vmatmul.bf16.gmra.mxu0 %v491
    %v931 = vpop.f32.mrf.mxu0
    %v932 = vadd.f32 %v763, %v931
    %v933 = vpop.f32.mrf.mxu0
    %v934 = vadd.f32 %v765, %v933
    %935 = vmatmul.bf16.gmra.mxu0 %v493
    %v936 = vpop.f32.mrf.mxu0
    %v937 = vadd.f32 %v768, %v936
    %v938 = vpop.f32.mrf.mxu0
    %v939 = vadd.f32 %v770, %v938
    %940 = vmatmul.bf16.gmra.mxu0 %v495
    %v941 = vpop.f32.mrf.mxu0
    %v942 = vadd.f32 %v773, %v941
    %v943 = vpop.f32.mrf.mxu0
    %v944 = vadd.f32 %v775, %v943
    %945 = vmatmul.bf16.gmra.mxu0 %v497
    %v946 = vpop.f32.mrf.mxu0
    %v947 = vadd.f32 %v778, %v946
    %v948 = vpop.f32.mrf.mxu0
    %v949 = vadd.f32 %v780, %v948
    %950 = vmatmul.bf16.gmra.mxu0 %v499
    %v951 = vpop.f32.mrf.mxu0
    %v952 = vadd.f32 %v783, %v951
    %v953 = vpop.f32.mrf.mxu0
    %v954 = vadd.f32 %v785, %v953
    %955 = vmatmul.bf16.gmra.mxu0 %v501
    %v956 = vpop.f32.mrf.mxu0
    %v957 = vadd.f32 %v788, %v956
    %v958 = vpop.f32.mrf.mxu0
    %v959 = vadd.f32 %v790, %v958
    %960 = vmatmul.bf16.gmra.mxu0 %v503
    %v961 = vpop.f32.mrf.mxu0
    %v962 = vadd.f32 %v793, %v961
    %v963 = vpop.f32.mrf.mxu0
    %v964 = vadd.f32 %v795, %v963
    %965 = vmatmul.bf16.gmra.mxu0 %v505
    %v966 = vpop.f32.mrf.mxu0
    %v967 = vadd.f32 %v798, %v966
    %v968 = vpop.f32.mrf.mxu0
    %v969 = vadd.f32 %v800, %v968
    %970 = vmatmul.bf16.gmra.mxu0 %v507
    %v971 = vpop.f32.mrf.mxu0
    %v972 = vadd.f32 %v803, %v971
    %v973 = vpop.f32.mrf.mxu0
    %v974 = vadd.f32 %v805, %v973
    %975 = vmatmul.bf16.gmra.mxu0 %v509
    %v976 = vpop.f32.mrf.mxu0
    %v977 = vadd.f32 %v808, %v976
    %v978 = vpop.f32.mrf.mxu0
    %v979 = vadd.f32 %v810, %v978
    %980 = vmatmul.bf16.gmra.mxu0 %v511
    %v981 = vpop.f32.mrf.mxu0
    %v982 = vadd.f32 %v813, %v981
    %v983 = vpop.f32.mrf.mxu0
    %v984 = vadd.f32 %v815, %v983
    %985 = vmatmul.bf16.gmra.mxu0 %v513
    %v986 = vpop.f32.mrf.mxu0
    %v987 = vadd.f32 %v818, %v986
    %v988 = vpop.f32.mrf.mxu0
    %v989 = vadd.f32 %v820, %v988
    %990 = vmatmul.bf16.gmra.mxu0 %v515
    %v991 = vpop.f32.mrf.mxu0
    %v992 = vadd.f32 %v823, %v991
    %v993 = vpop.f32.mrf.mxu0
    %v994 = vadd.f32 %v825, %v993
    %995 = vmatmul.bf16.gmra.mxu0 %v517
    %v996 = vpop.f32.mrf.mxu0
    %v997 = vadd.f32 %v828, %v996
    %v998 = vpop.f32.mrf.mxu0
    %v999 = vadd.f32 %v830, %v998
    %1000 = vmatmul.bf16.gmra.mxu0 %v519
    %v1001 = vpop.f32.mrf.mxu0
    %v1002 = vadd.f32 %v833, %v1001
    %v1003 = vpop.f32.mrf.mxu0
    %v1004 = vadd.f32 %v835, %v1003
    %1005 = vmatmul.bf16.gmra.mxu0 %v521
    %v1006 = vpop.f32.mrf.mxu0
    %v1007 = vadd.f32 %v838, %v1006
    %v1008 = vpop.f32.mrf.mxu0
    %v1009 = vadd.f32 %v840, %v1008
    %1010 = vmatmul.bf16.gmra.mxu0 %v523
    %v1011 = vpop.f32.mrf.mxu0
    %v1012 = vadd.f32 %v843, %v1011
    %v1013 = vpop.f32.mrf.mxu0
    %v1014 = vadd.f32 %v845, %v1013
    %1015 = vmatmul.bf16.gmra.mxu0 %v525
    %v1016 = vpop.f32.mrf.mxu0
    %v1017 = vadd.f32 %v848, %v1016
    %v1018 = vpop.f32.mrf.mxu0
    %v1019 = vadd.f32 %v850, %v1018
    %1020 = vmatmul.bf16.gmra.mxu0 %v527
    %v1021 = vpop.f32.mrf.mxu0
    %v1022 = vadd.f32 %v853, %v1021
    %v1023 = vpop.f32.mrf.mxu0
    %v1024 = vadd.f32 %v855, %v1023
    %1025 = vdwg.mxu0
    %v1026 = vadd.f32 %v112, %v867
    %v1027 = vadd.f32 %v113, %v869
    %v1028 = vadd.f32 %v114, %v872
    %v1029 = vadd.f32 %v115, %v874
    %v1030 = vadd.f32 %v116, %v877
    %v1031 = vadd.f32 %v117, %v879
    %v1032 = vadd.f32 %v118, %v882
    %v1033 = vadd.f32 %v119, %v884
    %v1034 = vadd.f32 %v120, %v887
    %v1035 = vadd.f32 %v121, %v889
    %v1036 = vadd.f32 %v122, %v892
    %v1037 = vadd.f32 %v123, %v894
    %v1038 = vadd.f32 %v124, %v897
    %v1039 = vadd.f32 %v125, %v899
    %v1040 = vadd.f32 %v126, %v902
    %v1041 = vadd.f32 %v127, %v904
    %v1042 = vadd.f32 %v128, %v907
    %v1043 = vadd.f32 %v129, %v909
    %v1044 = vadd.f32 %v130, %v912
    %v1045 = vadd.f32 %v131, %v914
    %v1046 = vadd.f32 %v132, %v917
    %v1047 = vadd.f32 %v133, %v919
    %v1048 = vadd.f32 %v134, %v922
    %v1049 = vadd.f32 %v135, %v924
    %v1050 = vadd.f32 %v136, %v927
    %v1051 = vadd.f32 %v137, %v929
    %v1052 = vadd.f32 %v138, %v932
    %v1053 = vadd.f32 %v139, %v934
    %v1054 = vadd.f32 %v140, %v937
    %v1055 = vadd.f32 %v141, %v939
    %v1056 = vadd.f32 %v142, %v942
    %v1057 = vadd.f32 %v143, %v944
    %v1058 = vadd.f32 %v144, %v947
    %v1059 = vadd.f32 %v145, %v949
    %v1060 = vadd.f32 %v146, %v952
    %v1061 = vadd.f32 %v147, %v954
    %v1062 = vadd.f32 %v148, %v957
    %v1063 = vadd.f32 %v149, %v959
    %v1064 = vadd.f32 %v150, %v962
    %v1065 = vadd.f32 %v151, %v964
    %v1066 = vadd.f32 %v152, %v967
    %v1067 = vadd.f32 %v153, %v969
    %v1068 = vadd.f32 %v154, %v972
    %v1069 = vadd.f32 %v155, %v974
    %v1070 = vadd.f32 %v156, %v977
    %v1071 = vadd.f32 %v157, %v979
    %v1072 = vadd.f32 %v158, %v982
    %v1073 = vadd.f32 %v159, %v984
    %v1074 = vadd.f32 %v160, %v987
    %v1075 = vadd.f32 %v161, %v989
    %v1076 = vadd.f32 %v162, %v992
    %v1077 = vadd.f32 %v163, %v994
    %v1078 = vadd.f32 %v164, %v997
    %v1079 = vadd.f32 %v165, %v999
    %v1080 = vadd.f32 %v166, %v1002
    %v1081 = vadd.f32 %v167, %v1004
    %v1082 = vadd.f32 %v168, %v1007
    %v1083 = vadd.f32 %v169, %v1009
    %v1084 = vadd.f32 %v170, %v1012
    %v1085 = vadd.f32 %v171, %v1014
    %v1086 = vadd.f32 %v172, %v1017
    %v1087 = vadd.f32 %v173, %v1019
    %v1088 = vadd.f32 %v174, %v1022
    %v1089 = vadd.f32 %v175, %v1024
    %1090 = vst [vmem:[#allocation2] sm:$0xff] %v1026
    %1091 = vst [vmem:[#allocation2 + $0x8] sm:$0xff] %v1027
    %1092 = vst [vmem:[#allocation2 + $0x10] sm:$0xff] %v1028
    %1093 = vst [vmem:[#allocation2 + $0x18] sm:$0xff] %v1029
    %1094 = vst [vmem:[#allocation2 + $0x20] sm:$0xff] %v1030
    %1095 = vst [vmem:[#allocation2 + $0x28] sm:$0xff] %v1031
    %1096 = vst [vmem:[#allocation2 + $0x30] sm:$0xff] %v1032
    %1097 = vst [vmem:[#allocation2 + $0x38] sm:$0xff] %v1033
    %1098 = vst [vmem:[#allocation2 + $0x40] sm:$0xff] %v1034
    %1099 = vst [vmem:[#allocation2 + $0x48] sm:$0xff] %v1035
    %1100 = vst [vmem:[#allocation2 + $0x50] sm:$0xff] %v1036
    %1101 = vst [vmem:[#allocation2 + $0x58] sm:$0xff] %v1037
    %1102 = vst [vmem:[#allocation2 + $0x60] sm:$0xff] %v1038
    %1103 = vst [vmem:[#allocation2 + $0x68] sm:$0xff] %v1039
    %1104 = vst [vmem:[#allocation2 + $0x70] sm:$0xff] %v1040
    %1105 = vst [vmem:[#allocation2 + $0x78] sm:$0xff] %v1041
    %1106 = vst [vmem:[#allocation2 + $0x80] sm:$0xff] %v1042
    %1107 = vst [vmem:[#allocation2 + $0x88] sm:$0xff] %v1043
    %1108 = vst [vmem:[#allocation2 + $0x90] sm:$0xff] %v1044
    %1109 = vst [vmem:[#allocation2 + $0x98] sm:$0xff] %v1045
    %1110 = vst [vmem:[#allocation2 + $0xa0] sm:$0xff] %v1046
    %1111 = vst [vmem:[#allocation2 + $0xa8] sm:$0xff] %v1047
    %1112 = vst [vmem:[#allocation2 + $0xb0] sm:$0xff] %v1048
    %1113 = vst [vmem:[#allocation2 + $0xb8] sm:$0xff] %v1049
    %1114 = vst [vmem:[#allocation2 + $0xc0] sm:$0xff] %v1050
    %1115 = vst [vmem:[#allocation2 + $0xc8] sm:$0xff] %v1051
    %1116 = vst [vmem:[#allocation2 + $0xd0] sm:$0xff] %v1052
    %1117 = vst [vmem:[#allocation2 + $0xd8] sm:$0xff] %v1053
    %1118 = vst [vmem:[#allocation2 + $0xe0] sm:$0xff] %v1054
    %1119 = vst [vmem:[#allocation2 + $0xe8] sm:$0xff] %v1055
    %1120 = vst [vmem:[#allocation2 + $0xf0] sm:$0xff] %v1056
    %1121 = vst [vmem:[#allocation2 + $0xf8] sm:$0xff] %v1057
    %1122 = vst [vmem:[#allocation2 + $0x100] sm:$0xff] %v1058
    %1123 = vst [vmem:[#allocation2 + $0x108] sm:$0xff] %v1059
    %1124 = vst [vmem:[#allocation2 + $0x110] sm:$0xff] %v1060
    %1125 = vst [vmem:[#allocation2 + $0x118] sm:$0xff] %v1061
    %1126 = vst [vmem:[#allocation2 + $0x120] sm:$0xff] %v1062
    %1127 = vst [vmem:[#allocation2 + $0x128] sm:$0xff] %v1063
    %1128 = vst [vmem:[#allocation2 + $0x130] sm:$0xff] %v1064
    %1129 = vst [vmem:[#allocation2 + $0x138] sm:$0xff] %v1065
    %1130 = vst [vmem:[#allocation2 + $0x140] sm:$0xff] %v1066
    %1131 = vst [vmem:[#allocation2 + $0x148] sm:$0xff] %v1067
    %1132 = vst [vmem:[#allocation2 + $0x150] sm:$0xff] %v1068
    %1133 = vst [vmem:[#allocation2 + $0x158] sm:$0xff] %v1069
    %1134 = vst [vmem:[#allocation2 + $0x160] sm:$0xff] %v1070
    %1135 = vst [vmem:[#allocation2 + $0x168] sm:$0xff] %v1071
    %1136 = vst [vmem:[#allocation2 + $0x170] sm:$0xff] %v1072
    %1137 = vst [vmem:[#allocation2 + $0x178] sm:$0xff] %v1073
    %1138 = vst [vmem:[#allocation2 + $0x180] sm:$0xff] %v1074
    %1139 = vst [vmem:[#allocation2 + $0x188] sm:$0xff] %v1075
    %1140 = vst [vmem:[#allocation2 + $0x190] sm:$0xff] %v1076
    %1141 = vst [vmem:[#allocation2 + $0x198] sm:$0xff] %v1077
    %1142 = vst [vmem:[#allocation2 + $0x1a0] sm:$0xff] %v1078
    %1143 = vst [vmem:[#allocation2 + $0x1a8] sm:$0xff] %v1079
    %1144 = vst [vmem:[#allocation2 + $0x1b0] sm:$0xff] %v1080
    %1145 = vst [vmem:[#allocation2 + $0x1b8] sm:$0xff] %v1081
    %1146 = vst [vmem:[#allocation2 + $0x1c0] sm:$0xff] %v1082
    %1147 = vst [vmem:[#allocation2 + $0x1c8] sm:$0xff] %v1083
    %1148 = vst [vmem:[#allocation2 + $0x1d0] sm:$0xff] %v1084
    %1149 = vst [vmem:[#allocation2 + $0x1d8] sm:$0xff] %v1085
    %1150 = vst [vmem:[#allocation2 + $0x1e0] sm:$0xff] %v1086
    %1151 = vst [vmem:[#allocation2 + $0x1e8] sm:$0xff] %v1087
    %1152 = vst [vmem:[#allocation2 + $0x1f0] sm:$0xff] %v1088
    %1153 = vst [vmem:[#allocation2 + $0x1f8] sm:$0xff] %v1089
    // Predicated region
    $region22: #{tpu_custom_call.1} parent=1 // pred_check
      %p1154 = pneg %p44
    $region23: #{tpu_custom_call.1} parent=1 // pred_check_branch
      %1156 = sbr.rel (%p1154) target = $region25
    $region24: #{tpu_custom_call.1} parent=1 // pred_region
      %v1157 = vld [vmem:[#allocation2] sm:$0xff]
      %v1158 = vld [vmem:[#allocation2 + $0x8] sm:$0xff]
      %v1159 = vld [vmem:[#allocation2 + $0x10] sm:$0xff]
      %v1160 = vld [vmem:[#allocation2 + $0x18] sm:$0xff]
      %v1161 = vld [vmem:[#allocation2 + $0x20] sm:$0xff]
      %v1162 = vld [vmem:[#allocation2 + $0x28] sm:$0xff]
      %v1163 = vld [vmem:[#allocation2 + $0x30] sm:$0xff]
      %v1164 = vld [vmem:[#allocation2 + $0x38] sm:$0xff]
      %v1165 = vld [vmem:[#allocation2 + $0x40] sm:$0xff]
      %v1166 = vld [vmem:[#allocation2 + $0x48] sm:$0xff]
      %v1167 = vld [vmem:[#allocation2 + $0x50] sm:$0xff]
      %v1168 = vld [vmem:[#allocation2 + $0x58] sm:$0xff]
      %v1169 = vld [vmem:[#allocation2 + $0x60] sm:$0xff]
      %v1170 = vld [vmem:[#allocation2 + $0x68] sm:$0xff]
      %v1171 = vld [vmem:[#allocation2 + $0x70] sm:$0xff]
      %v1172 = vld [vmem:[#allocation2 + $0x78] sm:$0xff]
      %v1173 = vld [vmem:[#allocation2 + $0x80] sm:$0xff]
      %v1174 = vld [vmem:[#allocation2 + $0x88] sm:$0xff]
      %v1175 = vld [vmem:[#allocation2 + $0x90] sm:$0xff]
      %v1176 = vld [vmem:[#allocation2 + $0x98] sm:$0xff]
      %v1177 = vld [vmem:[#allocation2 + $0xa0] sm:$0xff]
      %v1178 = vld [vmem:[#allocation2 + $0xa8] sm:$0xff]
      %v1179 = vld [vmem:[#allocation2 + $0xb0] sm:$0xff]
      %v1180 = vld [vmem:[#allocation2 + $0xb8] sm:$0xff]
      %v1181 = vld [vmem:[#allocation2 + $0xc0] sm:$0xff]
      %v1182 = vld [vmem:[#allocation2 + $0xc8] sm:$0xff]
      %v1183 = vld [vmem:[#allocation2 + $0xd0] sm:$0xff]
      %v1184 = vld [vmem:[#allocation2 + $0xd8] sm:$0xff]
      %v1185 = vld [vmem:[#allocation2 + $0xe0] sm:$0xff]
      %v1186 = vld [vmem:[#allocation2 + $0xe8] sm:$0xff]
      %v1187 = vld [vmem:[#allocation2 + $0xf0] sm:$0xff]
      %v1188 = vld [vmem:[#allocation2 + $0xf8] sm:$0xff]
      %v1189 = vld [vmem:[#allocation2 + $0x100] sm:$0xff]
      %v1190 = vld [vmem:[#allocation2 + $0x108] sm:$0xff]
      %v1191 = vld [vmem:[#allocation2 + $0x110] sm:$0xff]
      %v1192 = vld [vmem:[#allocation2 + $0x118] sm:$0xff]
      %v1193 = vld [vmem:[#allocation2 + $0x120] sm:$0xff]
      %v1194 = vld [vmem:[#allocation2 + $0x128] sm:$0xff]
      %v1195 = vld [vmem:[#allocation2 + $0x130] sm:$0xff]
      %v1196 = vld [vmem:[#allocation2 + $0x138] sm:$0xff]
      %v1197 = vld [vmem:[#allocation2 + $0x140] sm:$0xff]
      %v1198 = vld [vmem:[#allocation2 + $0x148] sm:$0xff]
      %v1199 = vld [vmem:[#allocation2 + $0x150] sm:$0xff]
      %v1200 = vld [vmem:[#allocation2 + $0x158] sm:$0xff]
      %v1201 = vld [vmem:[#allocation2 + $0x160] sm:$0xff]
      %v1202 = vld [vmem:[#allocation2 + $0x168] sm:$0xff]
      %v1203 = vld [vmem:[#allocation2 + $0x170] sm:$0xff]
      %v1204 = vld [vmem:[#allocation2 + $0x178] sm:$0xff]
      %v1205 = vld [vmem:[#allocation2 + $0x180] sm:$0xff]
      %v1206 = vld [vmem:[#allocation2 + $0x188] sm:$0xff]
      %v1207 = vld [vmem:[#allocation2 + $0x190] sm:$0xff]
      %v1208 = vld [vmem:[#allocation2 + $0x198] sm:$0xff]
      %v1209 = vld [vmem:[#allocation2 + $0x1a0] sm:$0xff]
      %v1210 = vld [vmem:[#allocation2 + $0x1a8] sm:$0xff]
      %v1211 = vld [vmem:[#allocation2 + $0x1b0] sm:$0xff]
      %v1212 = vld [vmem:[#allocation2 + $0x1b8] sm:$0xff]
      %v1213 = vld [vmem:[#allocation2 + $0x1c0] sm:$0xff]
      %v1214 = vld [vmem:[#allocation2 + $0x1c8] sm:$0xff]
      %v1215 = vld [vmem:[#allocation2 + $0x1d0] sm:$0xff]
      %v1216 = vld [vmem:[#allocation2 + $0x1d8] sm:$0xff]
      %v1217 = vld [vmem:[#allocation2 + $0x1e0] sm:$0xff]
      %v1218 = vld [vmem:[#allocation2 + $0x1e8] sm:$0xff]
      %v1219 = vld [vmem:[#allocation2 + $0x1f0] sm:$0xff]
      %v1220 = vld [vmem:[#allocation2 + $0x1f8] sm:$0xff]
      %v1221 = vpack.c.bf16 %v1157, %v1157
      %v1222 = vpack.c.bf16 %v1158, %v1158
      %v1223 = vpack.c.bf16 %v1159, %v1159
      %v1224 = vpack.c.bf16 %v1160, %v1160
      %v1225 = vpack.c.bf16 %v1161, %v1161
      %v1226 = vpack.c.bf16 %v1162, %v1162
      %v1227 = vpack.c.bf16 %v1163, %v1163
      %v1228 = vpack.c.bf16 %v1164, %v1164
      %v1229 = vpack.c.bf16 %v1165, %v1165
      %v1230 = vpack.c.bf16 %v1166, %v1166
      %v1231 = vpack.c.bf16 %v1167, %v1167
      %v1232 = vpack.c.bf16 %v1168, %v1168
      %v1233 = vpack.c.bf16 %v1169, %v1169
      %v1234 = vpack.c.bf16 %v1170, %v1170
      %v1235 = vpack.c.bf16 %v1171, %v1171
      %v1236 = vpack.c.bf16 %v1172, %v1172
      %v1237 = vpack.c.bf16 %v1173, %v1173
      %v1238 = vpack.c.bf16 %v1174, %v1174
      %v1239 = vpack.c.bf16 %v1175, %v1175
      %v1240 = vpack.c.bf16 %v1176, %v1176
      %v1241 = vpack.c.bf16 %v1177, %v1177
      %v1242 = vpack.c.bf16 %v1178, %v1178
      %v1243 = vpack.c.bf16 %v1179, %v1179
      %v1244 = vpack.c.bf16 %v1180, %v1180
      %v1245 = vpack.c.bf16 %v1181, %v1181
      %v1246 = vpack.c.bf16 %v1182, %v1182
      %v1247 = vpack.c.bf16 %v1183, %v1183
      %v1248 = vpack.c.bf16 %v1184, %v1184
      %v1249 = vpack.c.bf16 %v1185, %v1185
      %v1250 = vpack.c.bf16 %v1186, %v1186
      %v1251 = vpack.c.bf16 %v1187, %v1187
      %v1252 = vpack.c.bf16 %v1188, %v1188
      %v1253 = vpack.c.bf16 %v1189, %v1189
      %v1254 = vpack.c.bf16 %v1190, %v1190
      %v1255 = vpack.c.bf16 %v1191, %v1191
      %v1256 = vpack.c.bf16 %v1192, %v1192
      %v1257 = vpack.c.bf16 %v1193, %v1193
      %v1258 = vpack.c.bf16 %v1194, %v1194
      %v1259 = vpack.c.bf16 %v1195, %v1195
      %v1260 = vpack.c.bf16 %v1196, %v1196
      %v1261 = vpack.c.bf16 %v1197, %v1197
      %v1262 = vpack.c.bf16 %v1198, %v1198
      %v1263 = vpack.c.bf16 %v1199, %v1199
      %v1264 = vpack.c.bf16 %v1200, %v1200
      %v1265 = vpack.c.bf16 %v1201, %v1201
      %v1266 = vpack.c.bf16 %v1202, %v1202
      %v1267 = vpack.c.bf16 %v1203, %v1203
      %v1268 = vpack.c.bf16 %v1204, %v1204
      %v1269 = vpack.c.bf16 %v1205, %v1205
      %v1270 = vpack.c.bf16 %v1206, %v1206
      %v1271 = vpack.c.bf16 %v1207, %v1207
      %v1272 = vpack.c.bf16 %v1208, %v1208
      %v1273 = vpack.c.bf16 %v1209, %v1209
      %v1274 = vpack.c.bf16 %v1210, %v1210
      %v1275 = vpack.c.bf16 %v1211, %v1211
      %v1276 = vpack.c.bf16 %v1212, %v1212
      %v1277 = vpack.c.bf16 %v1213, %v1213
      %v1278 = vpack.c.bf16 %v1214, %v1214
      %v1279 = vpack.c.bf16 %v1215, %v1215
      %v1280 = vpack.c.bf16 %v1216, %v1216
      %v1281 = vpack.c.bf16 %v1217, %v1217
      %v1282 = vpack.c.bf16 %v1218, %v1218
      %v1283 = vpack.c.bf16 %v1219, %v1219
      %v1284 = vpack.c.bf16 %v1220, %v1220
      %1285 = vst [vmem:[#allocation8] sm:$0xf] %v1221
      %1286 = vst [vmem:[#allocation8 + $0x4] sm:$0xf] %v1222
      %1287 = vst [vmem:[#allocation8 + $0x8] sm:$0xf] %v1223
      %1288 = vst [vmem:[#allocation8 + $0xc] sm:$0xf] %v1224
      %1289 = vst [vmem:[#allocation8 + $0x10] sm:$0xf] %v1225
      %1290 = vst [vmem:[#allocation8 + $0x14] sm:$0xf] %v1226
      %1291 = vst [vmem:[#allocation8 + $0x18] sm:$0xf] %v1227
      %1292 = vst [vmem:[#allocation8 + $0x1c] sm:$0xf] %v1228
      %1293 = vst [vmem:[#allocation8 + $0x20] sm:$0xf] %v1229
      %1294 = vst [vmem:[#allocation8 + $0x24] sm:$0xf] %v1230
      %1295 = vst [vmem:[#allocation8 + $0x28] sm:$0xf] %v1231
      %1296 = vst [vmem:[#allocation8 + $0x2c] sm:$0xf] %v1232
      %1297 = vst [vmem:[#allocation8 + $0x30] sm:$0xf] %v1233
      %1298 = vst [vmem:[#allocation8 + $0x34] sm:$0xf] %v1234
      %1299 = vst [vmem:[#allocation8 + $0x38] sm:$0xf] %v1235
      %1300 = vst [vmem:[#allocation8 + $0x3c] sm:$0xf] %v1236
      %1301 = vst [vmem:[#allocation8 + $0x40] sm:$0xf] %v1237
      %1302 = vst [vmem:[#allocation8 + $0x44] sm:$0xf] %v1238
      %1303 = vst [vmem:[#allocation8 + $0x48] sm:$0xf] %v1239
      %1304 = vst [vmem:[#allocation8 + $0x4c] sm:$0xf] %v1240
      %1305 = vst [vmem:[#allocation8 + $0x50] sm:$0xf] %v1241
      %1306 = vst [vmem:[#allocation8 + $0x54] sm:$0xf] %v1242
      %1307 = vst [vmem:[#allocation8 + $0x58] sm:$0xf] %v1243
      %1308 = vst [vmem:[#allocation8 + $0x5c] sm:$0xf] %v1244
      %1309 = vst [vmem:[#allocation8 + $0x60] sm:$0xf] %v1245
      %1310 = vst [vmem:[#allocation8 + $0x64] sm:$0xf] %v1246
      %1311 = vst [vmem:[#allocation8 + $0x68] sm:$0xf] %v1247
      %1312 = vst [vmem:[#allocation8 + $0x6c] sm:$0xf] %v1248
      %1313 = vst [vmem:[#allocation8 + $0x70] sm:$0xf] %v1249
      %1314 = vst [vmem:[#allocation8 + $0x74] sm:$0xf] %v1250
      %1315 = vst [vmem:[#allocation8 + $0x78] sm:$0xf] %v1251
      %1316 = vst [vmem:[#allocation8 + $0x7c] sm:$0xf] %v1252
      %1317 = vst [vmem:[#allocation8 + $0x80] sm:$0xf] %v1253
      %1318 = vst [vmem:[#allocation8 + $0x84] sm:$0xf] %v1254
      %1319 = vst [vmem:[#allocation8 + $0x88] sm:$0xf] %v1255
      %1320 = vst [vmem:[#allocation8 + $0x8c] sm:$0xf] %v1256
      %1321 = vst [vmem:[#allocation8 + $0x90] sm:$0xf] %v1257
      %1322 = vst [vmem:[#allocation8 + $0x94] sm:$0xf] %v1258
      %1323 = vst [vmem:[#allocation8 + $0x98] sm:$0xf] %v1259
      %1324 = vst [vmem:[#allocation8 + $0x9c] sm:$0xf] %v1260
      %1325 = vst [vmem:[#allocation8 + $0xa0] sm:$0xf] %v1261
      %1326 = vst [vmem:[#allocation8 + $0xa4] sm:$0xf] %v1262
      %1327 = vst [vmem:[#allocation8 + $0xa8] sm:$0xf] %v1263
      %1328 = vst [vmem:[#allocation8 + $0xac] sm:$0xf] %v1264
      %1329 = vst [vmem:[#allocation8 + $0xb0] sm:$0xf] %v1265
      %1330 = vst [vmem:[#allocation8 + $0xb4] sm:$0xf] %v1266
      %1331 = vst [vmem:[#allocation8 + $0xb8] sm:$0xf] %v1267
      %1332 = vst [vmem:[#allocation8 + $0xbc] sm:$0xf] %v1268
      %1333 = vst [vmem:[#allocation8 + $0xc0] sm:$0xf] %v1269
      %1334 = vst [vmem:[#allocation8 + $0xc4] sm:$0xf] %v1270
      %1335 = vst [vmem:[#allocation8 + $0xc8] sm:$0xf] %v1271
      %1336 = vst [vmem:[#allocation8 + $0xcc] sm:$0xf] %v1272
      %1337 = vst [vmem:[#allocation8 + $0xd0] sm:$0xf] %v1273
      %1338 = vst [vmem:[#allocation8 + $0xd4] sm:$0xf] %v1274
      %1339 = vst [vmem:[#allocation8 + $0xd8] sm:$0xf] %v1275
      %1340 = vst [vmem:[#allocation8 + $0xdc] sm:$0xf] %v1276
      %1341 = vst [vmem:[#allocation8 + $0xe0] sm:$0xf] %v1277
      %1342 = vst [vmem:[#allocation8 + $0xe4] sm:$0xf] %v1278
      %1343 = vst [vmem:[#allocation8 + $0xe8] sm:$0xf] %v1279
      %1344 = vst [vmem:[#allocation8 + $0xec] sm:$0xf] %v1280
      %1345 = vst [vmem:[#allocation8 + $0xf0] sm:$0xf] %v1281
      %1346 = vst [vmem:[#allocation8 + $0xf4] sm:$0xf] %v1282
      %1347 = vst [vmem:[#allocation8 + $0xf8] sm:$0xf] %v1283
      %1348 = vst [vmem:[#allocation8 + $0xfc] sm:$0xf] %v1284
    $region25: #{tpu_custom_call.1} parent=1 // pred_fallthru
      _
    // Predicated region
    $region26: #{tpu_custom_call.1} parent=1 // pred_check
      _
    $region27: #{tpu_custom_call.1} parent=1 // pred_check_branch
      %1350 = sbr.rel (0) target = $region29
    $region28: #{tpu_custom_call.1} parent=1 // pred_region
      %1352 = vsyncadd [#allocation5], 0
      %s1353 = sshll.u32 [#allocation8], 4
      %s1354 = int_to_ptr.vmem [resolvable:$true] %s1353
      %s1355 = sshll.u32 %s2, 4
      %s1356 = int_to_ptr.hbm [resolvable:$true] %s1355
      %1361 = dma.vmem_to_hbm [thread:$0]  %s1354, 4096, %s1356, [#allocation5], 64, 64, 4
    $region29: #{tpu_custom_call.1} parent=1 // pred_fallthru
      _
    // Predicated region
    $region30: #{tpu_custom_call.1} parent=1 // pred_check
      _
    $region31: #{tpu_custom_call.1} parent=1 // pred_check_branch
      %1363 = sbr.rel (0) target = $region33
    $region32: #{tpu_custom_call.1} parent=1 // pred_region
      %1365 = dma.done [#allocation5], 4096
    $region33: #{tpu_custom_call.1} parent=1 // pred_fallthru
      _
    %1366 = vsyncpa [#allocation4], 1
    %1367 = vsyncpa [#allocation7], 1
    %1368 = vsyncpa [#allocation5], 1

</llo_original>
